<compile_context>
chip_gen: v7x
topology: tpu7x:2x2x1
jax: 0.10.0
libtpu: 0.0.40
codegen_flags: <defaults>
</compile_context>

<pallas_src>
import numpy as np
import jax
import jax.numpy as jnp
from jax.experimental import pallas as pl
from jax.experimental.pallas import tpu as pltpu


# ----------------------------- helpers -----------------------------

def _adaptive_pool_windows(l_in, l_out):
    """Exact PyTorch AdaptiveMaxPool1d window boundaries."""
    starts = [(i * l_in) // l_out for i in range(l_out)]
    ends = [-(-((i + 1) * l_in) // l_out) for i in range(l_out)]   # ceil div
    return list(zip(starts, ends))


def _round_up(x, m):
    return ((x + m - 1) // m) * m


# ----------------------------- fused Pallas kernel -----------------------------

def _make_fused_kernel(B, l_pad, m_acc, kernels, C, F, windows_per_branch):
    nk = len(kernels)
    max_k = max(kernels)

    def kernel(x_ref, wc_ref, bc_ref, w1_ref, b1_ref, w2_ref, b2_ref,
               o_ref, feat_ref):
        # (1) All conv branches in ONE accumulation over the batch-flattened rows.
        #     conv = sum of per-tap matmuls with a combined (max_k, E, nk*C)
        #     weight (taps >= k_j are zero for branch j).  Rows that straddle a
        #     batch boundary are computed but never read by the pooling below.
        acc = jnp.dot(x_ref[pl.ds(0, m_acc), :], wc_ref[0],
                      preferred_element_type=jnp.float32)
        for dk in range(1, max_k):
            acc += jnp.dot(x_ref[pl.ds(dk, m_acc), :], wc_ref[dk],
                           preferred_element_type=jnp.float32)
        acc = jnp.maximum(acc + bc_ref[...], 0.0)        # bias + ReLU, (m_acc, nk*C)

        # (2) AdaptiveMaxPool1d per branch (exact PyTorch windows), writing
        #     straight into the flattened per-batch feature layout (B, nk*F*C).
        feat_ref[...] = jnp.zeros_like(feat_ref)
        for b in range(B):
            base = b * l_pad
            for j in range(nk):
                c0 = j * C
                for f, (s, e) in enumerate(windows_per_branch[j]):
                    vec = jnp.max(acc[base + s:base + e, c0:c0 + C], axis=0)  # (C,)
                    off = (j * F + f) * C
                    feat_ref[b, off:off + C] = vec

        # (3) fc1 + ReLU (+ Dropout(0.5) identity) + classifier, all in-kernel.
        h = jnp.dot(feat_ref[...], w1_ref[...],
                    preferred_element_type=jnp.float32) + b1_ref[...]
        h = jnp.maximum(h, 0.0)
        # TODO(synk): Dropout(0.5) after ReLU is identity (inference semantics).
        o_ref[...] = jnp.dot(h, w2_ref[...],
                             preferred_element_type=jnp.float32) + b2_ref[...]

    return kernel


# ----------------------------- weight packing (one-time) -----------------------------

def pack_params(params, kernels, num_features):
    """One-time preprocessing of PyTorch-layout weights into fused-kernel layouts."""
    nk = len(kernels)
    max_k = max(kernels)
    C = params[f"conv{kernels[0]}_w"].shape[2]
    E = params[f"conv{kernels[0]}_w"].shape[1]
    F = num_features

    # Combined conv weight: (max_k, E, nk*C), zero taps for shorter kernels.
    wc = jnp.zeros((max_k, E, nk * C), jnp.float32)
    bparts = []
    for j, k in enumerate(kernels):
        wc = wc.at[:k, :, j * C:(j + 1) * C].set(params[f"conv{k}_w"])
        bparts.append(params[f"conv{k}_b"])
    bc = jnp.concatenate(bparts, axis=1)                 # (1, nk*C)

    # Reorder fc1 rows from PyTorch cat(dim=2).view(B,-1) order (c, j, f)
    # to the kernel's flattened feature order (j, f, c).
    n_feat = nk * F * C
    perm = np.empty((n_feat,), np.int32)
    for j in range(nk):
        for f in range(F):
            for c in range(C):
                perm[(j * F + f) * C + c] = c * (nk * F) + j * F + f

    return {
        "embedding": params["embedding"],
        "conv_w": wc, "conv_b": bc,
        "fc1_w": params["fc1_w"][perm], "fc1_b": params["fc1_b"],
        "cls_w": params["cls_w"], "cls_b": params["cls_b"],
    }


# ----------------------------- forward (single fused pallas_call) -----------------------------

def xmlcnn_forward(x_ids, packed, kernels, num_features):
    F = num_features
    nk = len(kernels)
    max_k = max(kernels)

    emb = packed["embedding"][x_ids]             # (B, L, E) gather — XLA glue
    # embedding dropout p=0.25: identity (inference)
    B, L, E = emb.shape
    C = packed["conv_b"].shape[1] // nk

    # PyTorch pads to max_k+1 when L < max(kernels).  Extra zero rows beyond the
    # valid range never reach a valid conv position, so over-padding is harmless;
    # we also add (max_k-1) slack per batch so flat per-tap slices stay in-bounds.
    l_eff = L if L >= max_k else max_k + 1
    l_pad = _round_up(l_eff + max_k - 1, 8)
    emb = jnp.pad(emb, ((0, 0), (0, l_pad - L), (0, 0)))
    x_flat = emb.reshape(B * l_pad, E)           # batch folded into matmul M dim

    m_acc = B * l_pad - (max_k - 1)
    windows = [_adaptive_pool_windows(l_eff - k + 1, F) for k in kernels]

    n_feat = nk * F * C
    H = packed["fc1_w"].shape[1]
    N = packed["cls_w"].shape[1]

    kernel = _make_fused_kernel(B, l_pad, m_acc, kernels, C, F, windows)
    return pl.pallas_call(
        kernel,
        out_shape=jax.ShapeDtypeStruct((B, N), jnp.float32),
        grid=(1,),
        in_specs=[
            pl.BlockSpec((B * l_pad, E), lambda i: (0, 0)),
            pl.BlockSpec((max_k, E, nk * C), lambda i: (0, 0, 0)),
            pl.BlockSpec((1, nk * C), lambda i: (0, 0)),
            pl.BlockSpec((n_feat, H), lambda i: (0, 0)),
            pl.BlockSpec((1, H), lambda i: (0, 0)),
            pl.BlockSpec((H, N), lambda i: (0, 0)),
            pl.BlockSpec((1, N), lambda i: (0, 0)),
        ],
        out_specs=pl.BlockSpec((B, N), lambda i: (0, 0)),
        scratch_shapes=[pltpu.VMEM((B, n_feat), jnp.float32)],
        compiler_params=pltpu.CompilerParams(
            dimension_semantics=("arbitrary",)),
    )(x_flat, packed["conv_w"], packed["conv_b"],
      packed["fc1_w"], packed["fc1_b"], packed["cls_w"], packed["cls_b"])


# ----------------------------- pure-JAX reference (PyTorch semantics) -----------------------------

def xmlcnn_reference(x_ids, params, kernels, num_features):
    emb = params["embedding"][x_ids]
    B, L, E = emb.shape
    max_k = max(kernels)
    if L < max_k:
        emb = jnp.pad(emb, ((0, 0), (0, max_k - L + 1), (0, 0)))
    feats = []
    for k in kernels:
        w = params[f"conv{k}_w"]                     # (k, E, C)
        b = params[f"conv{k}_b"]                     # (1, C)
        l_out = emb.shape[1] - k + 1
        acc = sum(jnp.einsum("ble,ec->blc", emb[:, dk:dk + l_out, :], w[dk])
                  for dk in range(k))
        acc = jnp.maximum(acc + b[None], 0.0)        # (B, l_out, C)
        windows = _adaptive_pool_windows(l_out, num_features)
        pooled = jnp.stack([jnp.max(acc[:, s:e, :], axis=1) for s, e in windows],
                           axis=1)                   # (B, F, C)
        feats.append(jnp.transpose(pooled, (0, 2, 1)))
    features = jnp.concatenate(feats, axis=2).reshape(B, -1)
    h = jnp.maximum(features @ params["fc1_w"] + params["fc1_b"], 0.0)
    return h @ params["cls_w"] + params["cls_b"]


# ----------------------------- parameter init (PyTorch-equivalent layouts) -----------------------------

def init_params(key, vocab_size, E, C, kernels, features_dim, hidden, num_labels):
    ks = jax.random.split(key, 4 + 2 * len(kernels))
    p = {}
    emb = 0.1 * jax.random.normal(ks[0], (vocab_size, E), jnp.float32)
    p["embedding"] = emb.at[1].set(0.0)              # padding_idx=1
    for i, k in enumerate(kernels):
        # PyTorch Conv1d weight is (C, E, k); store as (k, E, C) for channels-last matmul.
        w = 0.1 * jax.random.normal(ks[1 + 2 * i], (C, E, k), jnp.float32)
        p[f"conv{k}_w"] = jnp.transpose(w, (2, 1, 0))
        p[f"conv{k}_b"] = 0.1 * jax.random.normal(ks[2 + 2 * i], (1, C), jnp.float32)
    # PyTorch Linear weights are (out, in); store transposed, fc1 input ordering
    # matches PyTorch cat(dim=2).view(B,-1).
    p["fc1_w"] = 0.1 * jax.random.normal(ks[-3], (features_dim, hidden), jnp.float32)
    p["fc1_b"] = 0.1 * jax.random.normal(ks[-2], (1, hidden), jnp.float32)
    p["cls_w"] = 0.1 * jax.random.normal(ks[-1], (hidden, num_labels), jnp.float32)
    p["cls_b"] = jnp.zeros((1, num_labels), jnp.float32)
    return p


# ----------------------------- main -----------------------------

if __name__ == "__main__":
    # Small config consistent with the module (lstm=False, attention=False).
    B, L = 2, 16
    vocab_size, E = 50, 16
    kernels = [3, 5, 9]
    C = 8                 # channels
    F = 4                 # num_features (adaptive pool output size)
    hidden = 32
    num_labels = 6
    features_dim = C * F * len(kernels)

    key = jax.random.PRNGKey(0)
    k_param, k_data = jax.random.split(key)
    params = init_params(k_param, vocab_size, E, C, kernels,
                         features_dim, hidden, num_labels)
    x_ids = jax.random.randint(k_data, (B, L), 0, vocab_size, dtype=jnp.int32)

    packed = pack_params(params, kernels, F)      # one-time weight preprocessing
    fwd = jax.jit(lambda ids, p: xmlcnn_forward(ids, p, kernels, F))

    y = jax.block_until_ready(fwd(x_ids, packed))
    assert y.shape == (B, num_labels)

    y_ref = jax.block_until_ready(xmlcnn_reference(x_ids, params, kernels, F))
    np.testing.assert_allclose(np.asarray(y), np.asarray(y_ref),
                               rtol=1e-2, atol=1e-2)

    print("KERNEL_OK")
</pallas_src>

<mosaic_0001>
module attributes {stable_mosaic.version = 11 : i64} {
  func.func @kernel(%arg0: i32, %arg1: memref<48x16xf32, #tpu.memory_space<vmem>>, %arg2: memref<9x16x24xf32, #tpu.memory_space<vmem>>, %arg3: memref<1x24xf32, #tpu.memory_space<vmem>>, %arg4: memref<96x32xf32, #tpu.memory_space<vmem>>, %arg5: memref<1x32xf32, #tpu.memory_space<vmem>>, %arg6: memref<32x6xf32, #tpu.memory_space<vmem>>, %arg7: memref<1x6xf32, #tpu.memory_space<vmem>>, %arg8: memref<2x6xf32, #tpu.memory_space<vmem>>, %arg9: memref<2x96xf32, #tpu.memory_space<vmem>>) attributes {dimension_semantics = [#tpu.dimension_semantics<arbitrary>], iteration_bounds = array<i64: 1>, scalar_prefetch = 0 : i64, scratch_operands = 1 : i64, tpu.core_type = #tpu.core_type<tc>, window_params = [{pipeline_mode = #tpu.pipeline_mode<synchronous>, transform_indices = @transform_0, window_bounds = array<i64: 48, 16>}, {pipeline_mode = #tpu.pipeline_mode<synchronous>, transform_indices = @transform_1, window_bounds = array<i64: 9, 16, 24>}, {pipeline_mode = #tpu.pipeline_mode<synchronous>, transform_indices = @transform_2, window_bounds = array<i64: 1, 24>}, {pipeline_mode = #tpu.pipeline_mode<synchronous>, transform_indices = @transform_3, window_bounds = array<i64: 96, 32>}, {pipeline_mode = #tpu.pipeline_mode<synchronous>, transform_indices = @transform_4, window_bounds = array<i64: 1, 32>}, {pipeline_mode = #tpu.pipeline_mode<synchronous>, transform_indices = @transform_5, window_bounds = array<i64: 32, 6>}, {pipeline_mode = #tpu.pipeline_mode<synchronous>, transform_indices = @transform_6, window_bounds = array<i64: 1, 6>}, {pipeline_mode = #tpu.pipeline_mode<synchronous>, transform_indices = @transform_7, window_bounds = array<i64: 2, 6>}]} {
    %c0 = arith.constant 0 : index
    %c0_0 = arith.constant 0 : index
    %0 = vector.load %arg1[%c0, %c0_0] : memref<48x16xf32, #tpu.memory_space<vmem>>, vector<40x16xf32>
    %c0_1 = arith.constant 0 : index
    %c0_2 = arith.constant 0 : index
    %c0_3 = arith.constant 0 : index
    %1 = vector.load %arg2[%c0_1, %c0_2, %c0_3] : memref<9x16x24xf32, #tpu.memory_space<vmem>>, vector<1x16x24xf32>
    %2 = vector.shape_cast %1 : vector<1x16x24xf32> to vector<16x24xf32>
    %cst = arith.constant dense<0.000000e+00> : vector<40x24xf32>
    %3 = tpu.matmul %0, %2, %cst {dimension_numbers = #tpu.dot_dimension_numbers<[1], [0], [0], [1], [0, 0, 1, 1], [], []>} : vector<40x16xf32>, vector<16x24xf32>, vector<40x24xf32> -> vector<40x24xf32>
    %c1 = arith.constant 1 : index
    %c0_4 = arith.constant 0 : index
    %4 = vector.load %arg1[%c1, %c0_4] : memref<48x16xf32, #tpu.memory_space<vmem>>, vector<40x16xf32>
    %c1_5 = arith.constant 1 : index
    %c0_6 = arith.constant 0 : index
    %c0_7 = arith.constant 0 : index
    %5 = vector.load %arg2[%c1_5, %c0_6, %c0_7] : memref<9x16x24xf32, #tpu.memory_space<vmem>>, vector<1x16x24xf32>
    %6 = vector.shape_cast %5 : vector<1x16x24xf32> to vector<16x24xf32>
    %cst_8 = arith.constant dense<0.000000e+00> : vector<40x24xf32>
    %7 = tpu.matmul %4, %6, %cst_8 {dimension_numbers = #tpu.dot_dimension_numbers<[1], [0], [0], [1], [0, 0, 1, 1], [], []>} : vector<40x16xf32>, vector<16x24xf32>, vector<40x24xf32> -> vector<40x24xf32>
    %8 = arith.addf %3, %7 : vector<40x24xf32>
    %c2 = arith.constant 2 : index
    %c0_9 = arith.constant 0 : index
    %9 = vector.load %arg1[%c2, %c0_9] : memref<48x16xf32, #tpu.memory_space<vmem>>, vector<40x16xf32>
    %c2_10 = arith.constant 2 : index
    %c0_11 = arith.constant 0 : index
    %c0_12 = arith.constant 0 : index
    %10 = vector.load %arg2[%c2_10, %c0_11, %c0_12] : memref<9x16x24xf32, #tpu.memory_space<vmem>>, vector<1x16x24xf32>
    %11 = vector.shape_cast %10 : vector<1x16x24xf32> to vector<16x24xf32>
    %cst_13 = arith.constant dense<0.000000e+00> : vector<40x24xf32>
    %12 = tpu.matmul %9, %11, %cst_13 {dimension_numbers = #tpu.dot_dimension_numbers<[1], [0], [0], [1], [0, 0, 1, 1], [], []>} : vector<40x16xf32>, vector<16x24xf32>, vector<40x24xf32> -> vector<40x24xf32>
    %13 = arith.addf %8, %12 : vector<40x24xf32>
    %c3 = arith.constant 3 : index
    %c0_14 = arith.constant 0 : index
    %14 = vector.load %arg1[%c3, %c0_14] : memref<48x16xf32, #tpu.memory_space<vmem>>, vector<40x16xf32>
    %c3_15 = arith.constant 3 : index
    %c0_16 = arith.constant 0 : index
    %c0_17 = arith.constant 0 : index
    %15 = vector.load %arg2[%c3_15, %c0_16, %c0_17] : memref<9x16x24xf32, #tpu.memory_space<vmem>>, vector<1x16x24xf32>
    %16 = vector.shape_cast %15 : vector<1x16x24xf32> to vector<16x24xf32>
    %cst_18 = arith.constant dense<0.000000e+00> : vector<40x24xf32>
    %17 = tpu.matmul %14, %16, %cst_18 {dimension_numbers = #tpu.dot_dimension_numbers<[1], [0], [0], [1], [0, 0, 1, 1], [], []>} : vector<40x16xf32>, vector<16x24xf32>, vector<40x24xf32> -> vector<40x24xf32>
    %18 = arith.addf %13, %17 : vector<40x24xf32>
    %c4 = arith.constant 4 : index
    %c0_19 = arith.constant 0 : index
    %19 = vector.load %arg1[%c4, %c0_19] : memref<48x16xf32, #tpu.memory_space<vmem>>, vector<40x16xf32>
    %c4_20 = arith.constant 4 : index
    %c0_21 = arith.constant 0 : index
    %c0_22 = arith.constant 0 : index
    %20 = vector.load %arg2[%c4_20, %c0_21, %c0_22] : memref<9x16x24xf32, #tpu.memory_space<vmem>>, vector<1x16x24xf32>
    %21 = vector.shape_cast %20 : vector<1x16x24xf32> to vector<16x24xf32>
    %cst_23 = arith.constant dense<0.000000e+00> : vector<40x24xf32>
    %22 = tpu.matmul %19, %21, %cst_23 {dimension_numbers = #tpu.dot_dimension_numbers<[1], [0], [0], [1], [0, 0, 1, 1], [], []>} : vector<40x16xf32>, vector<16x24xf32>, vector<40x24xf32> -> vector<40x24xf32>
    %23 = arith.addf %18, %22 : vector<40x24xf32>
    %c5 = arith.constant 5 : index
    %c0_24 = arith.constant 0 : index
    %24 = vector.load %arg1[%c5, %c0_24] : memref<48x16xf32, #tpu.memory_space<vmem>>, vector<40x16xf32>
    %c5_25 = arith.constant 5 : index
    %c0_26 = arith.constant 0 : index
    %c0_27 = arith.constant 0 : index
    %25 = vector.load %arg2[%c5_25, %c0_26, %c0_27] : memref<9x16x24xf32, #tpu.memory_space<vmem>>, vector<1x16x24xf32>
    %26 = vector.shape_cast %25 : vector<1x16x24xf32> to vector<16x24xf32>
    %cst_28 = arith.constant dense<0.000000e+00> : vector<40x24xf32>
    %27 = tpu.matmul %24, %26, %cst_28 {dimension_numbers = #tpu.dot_dimension_numbers<[1], [0], [0], [1], [0, 0, 1, 1], [], []>} : vector<40x16xf32>, vector<16x24xf32>, vector<40x24xf32> -> vector<40x24xf32>
    %28 = arith.addf %23, %27 : vector<40x24xf32>
    %c6 = arith.constant 6 : index
    %c0_29 = arith.constant 0 : index
    %29 = vector.load %arg1[%c6, %c0_29] : memref<48x16xf32, #tpu.memory_space<vmem>>, vector<40x16xf32>
    %c6_30 = arith.constant 6 : index
    %c0_31 = arith.constant 0 : index
    %c0_32 = arith.constant 0 : index
    %30 = vector.load %arg2[%c6_30, %c0_31, %c0_32] : memref<9x16x24xf32, #tpu.memory_space<vmem>>, vector<1x16x24xf32>
    %31 = vector.shape_cast %30 : vector<1x16x24xf32> to vector<16x24xf32>
    %cst_33 = arith.constant dense<0.000000e+00> : vector<40x24xf32>
    %32 = tpu.matmul %29, %31, %cst_33 {dimension_numbers = #tpu.dot_dimension_numbers<[1], [0], [0], [1], [0, 0, 1, 1], [], []>} : vector<40x16xf32>, vector<16x24xf32>, vector<40x24xf32> -> vector<40x24xf32>
    %33 = arith.addf %28, %32 : vector<40x24xf32>
    %c7 = arith.constant 7 : index
    %c0_34 = arith.constant 0 : index
    %34 = vector.load %arg1[%c7, %c0_34] : memref<48x16xf32, #tpu.memory_space<vmem>>, vector<40x16xf32>
    %c7_35 = arith.constant 7 : index
    %c0_36 = arith.constant 0 : index
    %c0_37 = arith.constant 0 : index
    %35 = vector.load %arg2[%c7_35, %c0_36, %c0_37] : memref<9x16x24xf32, #tpu.memory_space<vmem>>, vector<1x16x24xf32>
    %36 = vector.shape_cast %35 : vector<1x16x24xf32> to vector<16x24xf32>
    %cst_38 = arith.constant dense<0.000000e+00> : vector<40x24xf32>
    %37 = tpu.matmul %34, %36, %cst_38 {dimension_numbers = #tpu.dot_dimension_numbers<[1], [0], [0], [1], [0, 0, 1, 1], [], []>} : vector<40x16xf32>, vector<16x24xf32>, vector<40x24xf32> -> vector<40x24xf32>
    %38 = arith.addf %33, %37 : vector<40x24xf32>
    %c8 = arith.constant 8 : index
    %c0_39 = arith.constant 0 : index
    %39 = vector.load %arg1[%c8, %c0_39] : memref<48x16xf32, #tpu.memory_space<vmem>>, vector<40x16xf32>
    %c8_40 = arith.constant 8 : index
    %c0_41 = arith.constant 0 : index
    %c0_42 = arith.constant 0 : index
    %40 = vector.load %arg2[%c8_40, %c0_41, %c0_42] : memref<9x16x24xf32, #tpu.memory_space<vmem>>, vector<1x16x24xf32>
    %41 = vector.shape_cast %40 : vector<1x16x24xf32> to vector<16x24xf32>
    %cst_43 = arith.constant dense<0.000000e+00> : vector<40x24xf32>
    %42 = tpu.matmul %39, %41, %cst_43 {dimension_numbers = #tpu.dot_dimension_numbers<[1], [0], [0], [1], [0, 0, 1, 1], [], []>} : vector<40x16xf32>, vector<16x24xf32>, vector<40x24xf32> -> vector<40x24xf32>
    %43 = arith.addf %38, %42 : vector<40x24xf32>
    %c0_44 = arith.constant 0 : index
    %c0_45 = arith.constant 0 : index
    %44 = vector.load %arg3[%c0_44, %c0_45] : memref<1x24xf32, #tpu.memory_space<vmem>>, vector<1x24xf32>
    %45 = vector.broadcast %44 : vector<1x24xf32> to vector<40x24xf32>
    %46 = arith.addf %43, %45 : vector<40x24xf32>
    %cst_46 = arith.constant 0.000000e+00 : f32
    %47 = vector.broadcast %cst_46 : f32 to vector<40x24xf32>
    %48 = arith.maximumf %46, %47 : vector<40x24xf32>
    %cst_47 = arith.constant 0.000000e+00 : f32
    %49 = vector.broadcast %cst_47 : f32 to vector<2x96xf32>
    %c0_48 = arith.constant 0 : index
    %c0_49 = arith.constant 0 : index
    %50 = vector.load %arg9[%c0_48, %c0_49] : memref<2x96xf32, #tpu.memory_space<vmem>>, vector<2x96xf32>
    tpu.vector_store %arg9[%c0_48, %c0_49], %49 {strides = array<i32>} : memref<2x96xf32, #tpu.memory_space<vmem>>, vector<2x96xf32>,
    %51 = vector.extract_strided_slice %48 {offsets = [0, 0], sizes = [4, 8], strides = [1, 1]} : vector<40x24xf32> to vector<4x8xf32>
    %cst_50 = arith.constant dense<0xFF800000> : vector<8xf32>
    %52 = vector.multi_reduction <maximumf>, %51, %cst_50 [0] : vector<4x8xf32> to vector<8xf32>
    %c0_51 = arith.constant 0 : index
    %c0_52 = arith.constant 0 : index
    %53 = vector.load %arg9[%c0_51, %c0_52] : memref<2x96xf32, #tpu.memory_space<vmem>>, vector<1x8xf32>
    %54 = vector.shape_cast %53 : vector<1x8xf32> to vector<8xf32>
    %55 = vector.shape_cast %52 : vector<8xf32> to vector<1x8xf32>
    tpu.vector_store %arg9[%c0_51, %c0_52], %55 {strides = array<i32>} : memref<2x96xf32, #tpu.memory_space<vmem>>, vector<1x8xf32>,
    %56 = vector.extract_strided_slice %48 {offsets = [3, 0], sizes = [4, 8], strides = [1, 1]} : vector<40x24xf32> to vector<4x8xf32>
    %cst_53 = arith.constant dense<0xFF800000> : vector<8xf32>
    %57 = vector.multi_reduction <maximumf>, %56, %cst_53 [0] : vector<4x8xf32> to vector<8xf32>
    %c0_54 = arith.constant 0 : index
    %c8_55 = arith.constant 8 : index
    %58 = vector.load %arg9[%c0_54, %c8_55] : memref<2x96xf32, #tpu.memory_space<vmem>>, vector<1x8xf32>
    %59 = vector.shape_cast %58 : vector<1x8xf32> to vector<8xf32>
    %60 = vector.shape_cast %57 : vector<8xf32> to vector<1x8xf32>
    tpu.vector_store %arg9[%c0_54, %c8_55], %60 {strides = array<i32>} : memref<2x96xf32, #tpu.memory_space<vmem>>, vector<1x8xf32>,
    %61 = vector.extract_strided_slice %48 {offsets = [7, 0], sizes = [4, 8], strides = [1, 1]} : vector<40x24xf32> to vector<4x8xf32>
    %cst_56 = arith.constant dense<0xFF800000> : vector<8xf32>
    %62 = vector.multi_reduction <maximumf>, %61, %cst_56 [0] : vector<4x8xf32> to vector<8xf32>
    %c0_57 = arith.constant 0 : index
    %c16 = arith.constant 16 : index
    %63 = vector.load %arg9[%c0_57, %c16] : memref<2x96xf32, #tpu.memory_space<vmem>>, vector<1x8xf32>
    %64 = vector.shape_cast %63 : vector<1x8xf32> to vector<8xf32>
    %65 = vector.shape_cast %62 : vector<8xf32> to vector<1x8xf32>
    tpu.vector_store %arg9[%c0_57, %c16], %65 {strides = array<i32>} : memref<2x96xf32, #tpu.memory_space<vmem>>, vector<1x8xf32>,
    %66 = vector.extract_strided_slice %48 {offsets = [10, 0], sizes = [4, 8], strides = [1, 1]} : vector<40x24xf32> to vector<4x8xf32>
    %cst_58 = arith.constant dense<0xFF800000> : vector<8xf32>
    %67 = vector.multi_reduction <maximumf>, %66, %cst_58 [0] : vector<4x8xf32> to vector<8xf32>
    %c0_59 = arith.constant 0 : index
    %c24 = arith.constant 24 : index
    %68 = vector.load %arg9[%c0_59, %c24] : memref<2x96xf32, #tpu.memory_space<vmem>>, vector<1x8xf32>
    %69 = vector.shape_cast %68 : vector<1x8xf32> to vector<8xf32>
    %70 = vector.shape_cast %67 : vector<8xf32> to vector<1x8xf32>
    tpu.vector_store %arg9[%c0_59, %c24], %70 {strides = array<i32>} : memref<2x96xf32, #tpu.memory_space<vmem>>, vector<1x8xf32>,
    %71 = vector.extract_strided_slice %48 {offsets = [0, 8], sizes = [3, 8], strides = [1, 1]} : vector<40x24xf32> to vector<3x8xf32>
    %cst_60 = arith.constant dense<0xFF800000> : vector<8xf32>
    %72 = vector.multi_reduction <maximumf>, %71, %cst_60 [0] : vector<3x8xf32> to vector<8xf32>
    %c0_61 = arith.constant 0 : index
    %c32 = arith.constant 32 : index
    %73 = vector.load %arg9[%c0_61, %c32] : memref<2x96xf32, #tpu.memory_space<vmem>>, vector<1x8xf32>
    %74 = vector.shape_cast %73 : vector<1x8xf32> to vector<8xf32>
    %75 = vector.shape_cast %72 : vector<8xf32> to vector<1x8xf32>
    tpu.vector_store %arg9[%c0_61, %c32], %75 {strides = array<i32>} : memref<2x96xf32, #tpu.memory_space<vmem>>, vector<1x8xf32>,
    %76 = vector.extract_strided_slice %48 {offsets = [3, 8], sizes = [3, 8], strides = [1, 1]} : vector<40x24xf32> to vector<3x8xf32>
    %cst_62 = arith.constant dense<0xFF800000> : vector<8xf32>
    %77 = vector.multi_reduction <maximumf>, %76, %cst_62 [0] : vector<3x8xf32> to vector<8xf32>
    %c0_63 = arith.constant 0 : index
    %c40 = arith.constant 40 : index
    %78 = vector.load %arg9[%c0_63, %c40] : memref<2x96xf32, #tpu.memory_space<vmem>>, vector<1x8xf32>
    %79 = vector.shape_cast %78 : vector<1x8xf32> to vector<8xf32>
    %80 = vector.shape_cast %77 : vector<8xf32> to vector<1x8xf32>
    tpu.vector_store %arg9[%c0_63, %c40], %80 {strides = array<i32>} : memref<2x96xf32, #tpu.memory_space<vmem>>, vector<1x8xf32>,
    %81 = vector.extract_strided_slice %48 {offsets = [6, 8], sizes = [3, 8], strides = [1, 1]} : vector<40x24xf32> to vector<3x8xf32>
    %cst_64 = arith.constant dense<0xFF800000> : vector<8xf32>
    %82 = vector.multi_reduction <maximumf>, %81, %cst_64 [0] : vector<3x8xf32> to vector<8xf32>
    %c0_65 = arith.constant 0 : index
    %c48 = arith.constant 48 : index
    %83 = vector.load %arg9[%c0_65, %c48] : memref<2x96xf32, #tpu.memory_space<vmem>>, vector<1x8xf32>
    %84 = vector.shape_cast %83 : vector<1x8xf32> to vector<8xf32>
    %85 = vector.shape_cast %82 : vector<8xf32> to vector<1x8xf32>
    tpu.vector_store %arg9[%c0_65, %c48], %85 {strides = array<i32>} : memref<2x96xf32, #tpu.memory_space<vmem>>, vector<1x8xf32>,
    %86 = vector.extract_strided_slice %48 {offsets = [9, 8], sizes = [3, 8], strides = [1, 1]} : vector<40x24xf32> to vector<3x8xf32>
    %cst_66 = arith.constant dense<0xFF800000> : vector<8xf32>
    %87 = vector.multi_reduction <maximumf>, %86, %cst_66 [0] : vector<3x8xf32> to vector<8xf32>
    %c0_67 = arith.constant 0 : index
    %c56 = arith.constant 56 : index
    %88 = vector.load %arg9[%c0_67, %c56] : memref<2x96xf32, #tpu.memory_space<vmem>>, vector<1x8xf32>
    %89 = vector.shape_cast %88 : vector<1x8xf32> to vector<8xf32>
    %90 = vector.shape_cast %87 : vector<8xf32> to vector<1x8xf32>
    tpu.vector_store %arg9[%c0_67, %c56], %90 {strides = array<i32>} : memref<2x96xf32, #tpu.memory_space<vmem>>, vector<1x8xf32>,
    %91 = vector.extract_strided_slice %48 {offsets = [0, 16], sizes = [2, 8], strides = [1, 1]} : vector<40x24xf32> to vector<2x8xf32>
    %cst_68 = arith.constant dense<0xFF800000> : vector<8xf32>
    %92 = vector.multi_reduction <maximumf>, %91, %cst_68 [0] : vector<2x8xf32> to vector<8xf32>
    %c0_69 = arith.constant 0 : index
    %c64 = arith.constant 64 : index
    %93 = vector.load %arg9[%c0_69, %c64] : memref<2x96xf32, #tpu.memory_space<vmem>>, vector<1x8xf32>
    %94 = vector.shape_cast %93 : vector<1x8xf32> to vector<8xf32>
    %95 = vector.shape_cast %92 : vector<8xf32> to vector<1x8xf32>
    tpu.vector_store %arg9[%c0_69, %c64], %95 {strides = array<i32>} : memref<2x96xf32, #tpu.memory_space<vmem>>, vector<1x8xf32>,
    %96 = vector.extract_strided_slice %48 {offsets = [2, 16], sizes = [2, 8], strides = [1, 1]} : vector<40x24xf32> to vector<2x8xf32>
    %cst_70 = arith.constant dense<0xFF800000> : vector<8xf32>
    %97 = vector.multi_reduction <maximumf>, %96, %cst_70 [0] : vector<2x8xf32> to vector<8xf32>
    %c0_71 = arith.constant 0 : index
    %c72 = arith.constant 72 : index
    %98 = vector.load %arg9[%c0_71, %c72] : memref<2x96xf32, #tpu.memory_space<vmem>>, vector<1x8xf32>
    %99 = vector.shape_cast %98 : vector<1x8xf32> to vector<8xf32>
    %100 = vector.shape_cast %97 : vector<8xf32> to vector<1x8xf32>
    tpu.vector_store %arg9[%c0_71, %c72], %100 {strides = array<i32>} : memref<2x96xf32, #tpu.memory_space<vmem>>, vector<1x8xf32>,
    %101 = vector.extract_strided_slice %48 {offsets = [4, 16], sizes = [2, 8], strides = [1, 1]} : vector<40x24xf32> to vector<2x8xf32>
    %cst_72 = arith.constant dense<0xFF800000> : vector<8xf32>
    %102 = vector.multi_reduction <maximumf>, %101, %cst_72 [0] : vector<2x8xf32> to vector<8xf32>
    %c0_73 = arith.constant 0 : index
    %c80 = arith.constant 80 : index
    %103 = vector.load %arg9[%c0_73, %c80] : memref<2x96xf32, #tpu.memory_space<vmem>>, vector<1x8xf32>
    %104 = vector.shape_cast %103 : vector<1x8xf32> to vector<8xf32>
    %105 = vector.shape_cast %102 : vector<8xf32> to vector<1x8xf32>
    tpu.vector_store %arg9[%c0_73, %c80], %105 {strides = array<i32>} : memref<2x96xf32, #tpu.memory_space<vmem>>, vector<1x8xf32>,
    %106 = vector.extract_strided_slice %48 {offsets = [6, 16], sizes = [2, 8], strides = [1, 1]} : vector<40x24xf32> to vector<2x8xf32>
    %cst_74 = arith.constant dense<0xFF800000> : vector<8xf32>
    %107 = vector.multi_reduction <maximumf>, %106, %cst_74 [0] : vector<2x8xf32> to vector<8xf32>
    %c0_75 = arith.constant 0 : index
    %c88 = arith.constant 88 : index
    %108 = vector.load %arg9[%c0_75, %c88] : memref<2x96xf32, #tpu.memory_space<vmem>>, vector<1x8xf32>
    %109 = vector.shape_cast %108 : vector<1x8xf32> to vector<8xf32>
    %110 = vector.shape_cast %107 : vector<8xf32> to vector<1x8xf32>
    tpu.vector_store %arg9[%c0_75, %c88], %110 {strides = array<i32>} : memref<2x96xf32, #tpu.memory_space<vmem>>, vector<1x8xf32>,
    %111 = vector.extract_strided_slice %48 {offsets = [24, 0], sizes = [4, 8], strides = [1, 1]} : vector<40x24xf32> to vector<4x8xf32>
    %cst_76 = arith.constant dense<0xFF800000> : vector<8xf32>
    %112 = vector.multi_reduction <maximumf>, %111, %cst_76 [0] : vector<4x8xf32> to vector<8xf32>
    %c1_77 = arith.constant 1 : index
    %c0_78 = arith.constant 0 : index
    %113 = vector.load %arg9[%c1_77, %c0_78] : memref<2x96xf32, #tpu.memory_space<vmem>>, vector<1x8xf32>
    %114 = vector.shape_cast %113 : vector<1x8xf32> to vector<8xf32>
    %115 = vector.shape_cast %112 : vector<8xf32> to vector<1x8xf32>
    tpu.vector_store %arg9[%c1_77, %c0_78], %115 {strides = array<i32>} : memref<2x96xf32, #tpu.memory_space<vmem>>, vector<1x8xf32>,
    %116 = vector.extract_strided_slice %48 {offsets = [27, 0], sizes = [4, 8], strides = [1, 1]} : vector<40x24xf32> to vector<4x8xf32>
    %cst_79 = arith.constant dense<0xFF800000> : vector<8xf32>
    %117 = vector.multi_reduction <maximumf>, %116, %cst_79 [0] : vector<4x8xf32> to vector<8xf32>
    %c1_80 = arith.constant 1 : index
    %c8_81 = arith.constant 8 : index
    %118 = vector.load %arg9[%c1_80, %c8_81] : memref<2x96xf32, #tpu.memory_space<vmem>>, vector<1x8xf32>
    %119 = vector.shape_cast %118 : vector<1x8xf32> to vector<8xf32>
    %120 = vector.shape_cast %117 : vector<8xf32> to vector<1x8xf32>
    tpu.vector_store %arg9[%c1_80, %c8_81], %120 {strides = array<i32>} : memref<2x96xf32, #tpu.memory_space<vmem>>, vector<1x8xf32>,
    %121 = vector.extract_strided_slice %48 {offsets = [31, 0], sizes = [4, 8], strides = [1, 1]} : vector<40x24xf32> to vector<4x8xf32>
    %cst_82 = arith.constant dense<0xFF800000> : vector<8xf32>
    %122 = vector.multi_reduction <maximumf>, %121, %cst_82 [0] : vector<4x8xf32> to vector<8xf32>
    %c1_83 = arith.constant 1 : index
    %c16_84 = arith.constant 16 : index
    %123 = vector.load %arg9[%c1_83, %c16_84] : memref<2x96xf32, #tpu.memory_space<vmem>>, vector<1x8xf32>
    %124 = vector.shape_cast %123 : vector<1x8xf32> to vector<8xf32>
    %125 = vector.shape_cast %122 : vector<8xf32> to vector<1x8xf32>
    tpu.vector_store %arg9[%c1_83, %c16_84], %125 {strides = array<i32>} : memref<2x96xf32, #tpu.memory_space<vmem>>, vector<1x8xf32>,
    %126 = vector.extract_strided_slice %48 {offsets = [34, 0], sizes = [4, 8], strides = [1, 1]} : vector<40x24xf32> to vector<4x8xf32>
    %cst_85 = arith.constant dense<0xFF800000> : vector<8xf32>
    %127 = vector.multi_reduction <maximumf>, %126, %cst_85 [0] : vector<4x8xf32> to vector<8xf32>
    %c1_86 = arith.constant 1 : index
    %c24_87 = arith.constant 24 : index
    %128 = vector.load %arg9[%c1_86, %c24_87] : memref<2x96xf32, #tpu.memory_space<vmem>>, vector<1x8xf32>
    %129 = vector.shape_cast %128 : vector<1x8xf32> to vector<8xf32>
    %130 = vector.shape_cast %127 : vector<8xf32> to vector<1x8xf32>
    tpu.vector_store %arg9[%c1_86, %c24_87], %130 {strides = array<i32>} : memref<2x96xf32, #tpu.memory_space<vmem>>, vector<1x8xf32>,
    %131 = vector.extract_strided_slice %48 {offsets = [24, 8], sizes = [3, 8], strides = [1, 1]} : vector<40x24xf32> to vector<3x8xf32>
    %cst_88 = arith.constant dense<0xFF800000> : vector<8xf32>
    %132 = vector.multi_reduction <maximumf>, %131, %cst_88 [0] : vector<3x8xf32> to vector<8xf32>
    %c1_89 = arith.constant 1 : index
    %c32_90 = arith.constant 32 : index
    %133 = vector.load %arg9[%c1_89, %c32_90] : memref<2x96xf32, #tpu.memory_space<vmem>>, vector<1x8xf32>
    %134 = vector.shape_cast %133 : vector<1x8xf32> to vector<8xf32>
    %135 = vector.shape_cast %132 : vector<8xf32> to vector<1x8xf32>
    tpu.vector_store %arg9[%c1_89, %c32_90], %135 {strides = array<i32>} : memref<2x96xf32, #tpu.memory_space<vmem>>, vector<1x8xf32>,
    %136 = vector.extract_strided_slice %48 {offsets = [27, 8], sizes = [3, 8], strides = [1, 1]} : vector<40x24xf32> to vector<3x8xf32>
    %cst_91 = arith.constant dense<0xFF800000> : vector<8xf32>
    %137 = vector.multi_reduction <maximumf>, %136, %cst_91 [0] : vector<3x8xf32> to vector<8xf32>
    %c1_92 = arith.constant 1 : index
    %c40_93 = arith.constant 40 : index
    %138 = vector.load %arg9[%c1_92, %c40_93] : memref<2x96xf32, #tpu.memory_space<vmem>>, vector<1x8xf32>
    %139 = vector.shape_cast %138 : vector<1x8xf32> to vector<8xf32>
    %140 = vector.shape_cast %137 : vector<8xf32> to vector<1x8xf32>
    tpu.vector_store %arg9[%c1_92, %c40_93], %140 {strides = array<i32>} : memref<2x96xf32, #tpu.memory_space<vmem>>, vector<1x8xf32>,
    %141 = vector.extract_strided_slice %48 {offsets = [30, 8], sizes = [3, 8], strides = [1, 1]} : vector<40x24xf32> to vector<3x8xf32>
    %cst_94 = arith.constant dense<0xFF800000> : vector<8xf32>
    %142 = vector.multi_reduction <maximumf>, %141, %cst_94 [0] : vector<3x8xf32> to vector<8xf32>
    %c1_95 = arith.constant 1 : index
    %c48_96 = arith.constant 48 : index
    %143 = vector.load %arg9[%c1_95, %c48_96] : memref<2x96xf32, #tpu.memory_space<vmem>>, vector<1x8xf32>
    %144 = vector.shape_cast %143 : vector<1x8xf32> to vector<8xf32>
    %145 = vector.shape_cast %142 : vector<8xf32> to vector<1x8xf32>
    tpu.vector_store %arg9[%c1_95, %c48_96], %145 {strides = array<i32>} : memref<2x96xf32, #tpu.memory_space<vmem>>, vector<1x8xf32>,
    %146 = vector.extract_strided_slice %48 {offsets = [33, 8], sizes = [3, 8], strides = [1, 1]} : vector<40x24xf32> to vector<3x8xf32>
    %cst_97 = arith.constant dense<0xFF800000> : vector<8xf32>
    %147 = vector.multi_reduction <maximumf>, %146, %cst_97 [0] : vector<3x8xf32> to vector<8xf32>
    %c1_98 = arith.constant 1 : index
    %c56_99 = arith.constant 56 : index
    %148 = vector.load %arg9[%c1_98, %c56_99] : memref<2x96xf32, #tpu.memory_space<vmem>>, vector<1x8xf32>
    %149 = vector.shape_cast %148 : vector<1x8xf32> to vector<8xf32>
    %150 = vector.shape_cast %147 : vector<8xf32> to vector<1x8xf32>
    tpu.vector_store %arg9[%c1_98, %c56_99], %150 {strides = array<i32>} : memref<2x96xf32, #tpu.memory_space<vmem>>, vector<1x8xf32>,
    %151 = vector.extract_strided_slice %48 {offsets = [24, 16], sizes = [2, 8], strides = [1, 1]} : vector<40x24xf32> to vector<2x8xf32>
    %cst_100 = arith.constant dense<0xFF800000> : vector<8xf32>
    %152 = vector.multi_reduction <maximumf>, %151, %cst_100 [0] : vector<2x8xf32> to vector<8xf32>
    %c1_101 = arith.constant 1 : index
    %c64_102 = arith.constant 64 : index
    %153 = vector.load %arg9[%c1_101, %c64_102] : memref<2x96xf32, #tpu.memory_space<vmem>>, vector<1x8xf32>
    %154 = vector.shape_cast %153 : vector<1x8xf32> to vector<8xf32>
    %155 = vector.shape_cast %152 : vector<8xf32> to vector<1x8xf32>
    tpu.vector_store %arg9[%c1_101, %c64_102], %155 {strides = array<i32>} : memref<2x96xf32, #tpu.memory_space<vmem>>, vector<1x8xf32>,
    %156 = vector.extract_strided_slice %48 {offsets = [26, 16], sizes = [2, 8], strides = [1, 1]} : vector<40x24xf32> to vector<2x8xf32>
    %cst_103 = arith.constant dense<0xFF800000> : vector<8xf32>
    %157 = vector.multi_reduction <maximumf>, %156, %cst_103 [0] : vector<2x8xf32> to vector<8xf32>
    %c1_104 = arith.constant 1 : index
    %c72_105 = arith.constant 72 : index
    %158 = vector.load %arg9[%c1_104, %c72_105] : memref<2x96xf32, #tpu.memory_space<vmem>>, vector<1x8xf32>
    %159 = vector.shape_cast %158 : vector<1x8xf32> to vector<8xf32>
    %160 = vector.shape_cast %157 : vector<8xf32> to vector<1x8xf32>
    tpu.vector_store %arg9[%c1_104, %c72_105], %160 {strides = array<i32>} : memref<2x96xf32, #tpu.memory_space<vmem>>, vector<1x8xf32>,
    %161 = vector.extract_strided_slice %48 {offsets = [28, 16], sizes = [2, 8], strides = [1, 1]} : vector<40x24xf32> to vector<2x8xf32>
    %cst_106 = arith.constant dense<0xFF800000> : vector<8xf32>
    %162 = vector.multi_reduction <maximumf>, %161, %cst_106 [0] : vector<2x8xf32> to vector<8xf32>
    %c1_107 = arith.constant 1 : index
    %c80_108 = arith.constant 80 : index
    %163 = vector.load %arg9[%c1_107, %c80_108] : memref<2x96xf32, #tpu.memory_space<vmem>>, vector<1x8xf32>
    %164 = vector.shape_cast %163 : vector<1x8xf32> to vector<8xf32>
    %165 = vector.shape_cast %162 : vector<8xf32> to vector<1x8xf32>
    tpu.vector_store %arg9[%c1_107, %c80_108], %165 {strides = array<i32>} : memref<2x96xf32, #tpu.memory_space<vmem>>, vector<1x8xf32>,
    %166 = vector.extract_strided_slice %48 {offsets = [30, 16], sizes = [2, 8], strides = [1, 1]} : vector<40x24xf32> to vector<2x8xf32>
    %cst_109 = arith.constant dense<0xFF800000> : vector<8xf32>
    %167 = vector.multi_reduction <maximumf>, %166, %cst_109 [0] : vector<2x8xf32> to vector<8xf32>
    %c1_110 = arith.constant 1 : index
    %c88_111 = arith.constant 88 : index
    %168 = vector.load %arg9[%c1_110, %c88_111] : memref<2x96xf32, #tpu.memory_space<vmem>>, vector<1x8xf32>
    %169 = vector.shape_cast %168 : vector<1x8xf32> to vector<8xf32>
    %170 = vector.shape_cast %167 : vector<8xf32> to vector<1x8xf32>
    tpu.vector_store %arg9[%c1_110, %c88_111], %170 {strides = array<i32>} : memref<2x96xf32, #tpu.memory_space<vmem>>, vector<1x8xf32>,
    %c0_112 = arith.constant 0 : index
    %c0_113 = arith.constant 0 : index
    %171 = vector.load %arg9[%c0_112, %c0_113] : memref<2x96xf32, #tpu.memory_space<vmem>>, vector<2x96xf32>
    %c0_114 = arith.constant 0 : index
    %c0_115 = arith.constant 0 : index
    %172 = vector.load %arg4[%c0_114, %c0_115] : memref<96x32xf32, #tpu.memory_space<vmem>>, vector<96x32xf32>
    %cst_116 = arith.constant dense<0.000000e+00> : vector<2x32xf32>
    %173 = tpu.matmul %171, %172, %cst_116 {dimension_numbers = #tpu.dot_dimension_numbers<[1], [0], [0], [1], [0, 0, 1, 1], [], []>} : vector<2x96xf32>, vector<96x32xf32>, vector<2x32xf32> -> vector<2x32xf32>
    %c0_117 = arith.constant 0 : index
    %c0_118 = arith.constant 0 : index
    %174 = vector.load %arg5[%c0_117, %c0_118] : memref<1x32xf32, #tpu.memory_space<vmem>>, vector<1x32xf32>
    %175 = vector.broadcast %174 : vector<1x32xf32> to vector<2x32xf32>
    %176 = arith.addf %173, %175 : vector<2x32xf32>
    %cst_119 = arith.constant 0.000000e+00 : f32
    %177 = vector.broadcast %cst_119 : f32 to vector<2x32xf32>
    %178 = arith.maximumf %176, %177 : vector<2x32xf32>
    %c0_120 = arith.constant 0 : index
    %c0_121 = arith.constant 0 : index
    %179 = vector.load %arg6[%c0_120, %c0_121] : memref<32x6xf32, #tpu.memory_space<vmem>>, vector<32x6xf32>
    %cst_122 = arith.constant dense<0.000000e+00> : vector<2x6xf32>
    %180 = tpu.matmul %178, %179, %cst_122 {dimension_numbers = #tpu.dot_dimension_numbers<[1], [0], [0], [1], [0, 0, 1, 1], [], []>} : vector<2x32xf32>, vector<32x6xf32>, vector<2x6xf32> -> vector<2x6xf32>
    %c0_123 = arith.constant 0 : index
    %c0_124 = arith.constant 0 : index
    %181 = vector.load %arg7[%c0_123, %c0_124] : memref<1x6xf32, #tpu.memory_space<vmem>>, vector<1x6xf32>
    %182 = vector.broadcast %181 : vector<1x6xf32> to vector<2x6xf32>
    %183 = arith.addf %180, %182 : vector<2x6xf32>
    %c0_125 = arith.constant 0 : index
    %c0_126 = arith.constant 0 : index
    %184 = vector.load %arg8[%c0_125, %c0_126] : memref<2x6xf32, #tpu.memory_space<vmem>>, vector<2x6xf32>
    tpu.vector_store %arg8[%c0_125, %c0_126], %183 {strides = array<i32>} : memref<2x6xf32, #tpu.memory_space<vmem>>, vector<2x6xf32>,
    return
  }
  func.func @transform_0(%arg0: i32) -> (i32, i32) {
    %c0_i32 = arith.constant 0 : i32
    %c0_i32_0 = arith.constant 0 : i32
    %c0_i32_1 = arith.constant 0 : i32
    return %c0_i32, %c0_i32_0 : i32, i32
  }
  func.func @transform_1(%arg0: i32) -> (i32, i32, i32) {
    %c0_i32 = arith.constant 0 : i32
    %c0_i32_0 = arith.constant 0 : i32
    %c0_i32_1 = arith.constant 0 : i32
    %c0_i32_2 = arith.constant 0 : i32
    return %c0_i32, %c0_i32_0, %c0_i32_1 : i32, i32, i32
  }
  func.func @transform_2(%arg0: i32) -> (i32, i32) {
    %c0_i32 = arith.constant 0 : i32
    %c0_i32_0 = arith.constant 0 : i32
    %c0_i32_1 = arith.constant 0 : i32
    return %c0_i32, %c0_i32_0 : i32, i32
  }
  func.func @transform_3(%arg0: i32) -> (i32, i32) {
    %c0_i32 = arith.constant 0 : i32
    %c0_i32_0 = arith.constant 0 : i32
    %c0_i32_1 = arith.constant 0 : i32
    return %c0_i32, %c0_i32_0 : i32, i32
  }
  func.func @transform_4(%arg0: i32) -> (i32, i32) {
    %c0_i32 = arith.constant 0 : i32
    %c0_i32_0 = arith.constant 0 : i32
    %c0_i32_1 = arith.constant 0 : i32
    return %c0_i32, %c0_i32_0 : i32, i32
  }
  func.func @transform_5(%arg0: i32) -> (i32, i32) {
    %c0_i32 = arith.constant 0 : i32
    %c0_i32_0 = arith.constant 0 : i32
    %c0_i32_1 = arith.constant 0 : i32
    return %c0_i32, %c0_i32_0 : i32, i32
  }
  func.func @transform_6(%arg0: i32) -> (i32, i32) {
    %c0_i32 = arith.constant 0 : i32
    %c0_i32_0 = arith.constant 0 : i32
    %c0_i32_1 = arith.constant 0 : i32
    return %c0_i32, %c0_i32_0 : i32, i32
  }
  func.func @transform_7(%arg0: i32) -> (i32, i32) {
    %c0_i32 = arith.constant 0 : i32
    %c0_i32_0 = arith.constant 0 : i32
    %c0_i32_1 = arith.constant 0 : i32
    return %c0_i32, %c0_i32_0 : i32, i32
  }
}

</mosaic_0001>

<llo_original>
// kernel: _lambda_.1
$region0: #{_lambda_.1}
  #allocation0 [shape = 'u32[]', space=smem, size = 0x4, offset = 0x4, fixed_abs, tag = 'smem constant byte address 0x4 - core index']
  #allocation1 [shape = 'u32[144,128]{1,0:T(1,128)}', space=vmem, size = 0x12000, scoped, tag = 'internal scratch']
  #allocation2 [shape = 'f32[2,96]{1,0:T(2,128)}', space=vmem, size = 0x400, scoped, tag = 'scratch operand']
  %s0 = inlined_call_operand.vmem [shape: f32[48,16], index: 0, kind: input, shape index: {}]
  %s1 = inlined_call_operand.vmem [shape: f32[9,16,24], index: 1, kind: input, shape index: {}]
  %s2 = inlined_call_operand.vmem [shape: f32[1,24], index: 2, kind: input, shape index: {}]
  %s3 = inlined_call_operand.vmem [shape: f32[96,32], index: 3, kind: input, shape index: {}]
  %s4 = inlined_call_operand.vmem [shape: f32[1,32], index: 4, kind: input, shape index: {}]
  %s5 = inlined_call_operand.vmem [shape: f32[32,6], index: 5, kind: input, shape index: {}]
  %s6 = inlined_call_operand.vmem [shape: f32[1,6], index: 6, kind: input, shape index: {}]
  %s7 = inlined_call_operand.hbm [shape: f32[2,6], index: 7, kind: output, shape index: {}]
  %s8 = sld [smem:[#allocation0]]
  $region38: #{_lambda_.1} parent=0
    _
  %s10 = ssub.s32 1, %s8
  %s11 = scalar_select 0, %s10, %s8
  $region1: #{_lambda_.1} parent=0
    #allocation3 [shape = 'u8[1024]{0}', space=vmem, size = 0x400, scoped, tag = 'output window, operand 0, single buffered']
    #allocation4 [shape = 's32[1]{0}', space=sflag, size = 0x4, scoped, tag = 'scoped memory for _lambda_.1']
    %12 = vsyncpa [#allocation4], 0
    // Predicated region
    $region2: #{_lambda_.1} parent=1 // pred_check
      _
    $region3: #{_lambda_.1} parent=1 // pred_check_branch
      %14 = sbr.rel (0) target = $region5
    $region4: #{_lambda_.1} parent=1 // pred_region
      _
    $region5: #{_lambda_.1} parent=1 // pred_fallthru
      _
    // Predicated region
    $region6: #{_lambda_.1} parent=1 // pred_check
      _
    $region7: #{_lambda_.1} parent=1 // pred_check_branch
      %16 = sbr.rel (0) target = $region9
    $region8: #{_lambda_.1} parent=1 // pred_region
      _
    $region9: #{_lambda_.1} parent=1 // pred_fallthru
      _
    // Predicated region
    $region10: #{_lambda_.1} parent=1 // pred_check
      _
    $region11: #{_lambda_.1} parent=1 // pred_check_branch
      %18 = sbr.rel (0) target = $region13
    $region12: #{_lambda_.1} parent=1 // pred_region
      _
    $region13: #{_lambda_.1} parent=1 // pred_fallthru
      _
    // Predicated region
    $region14: #{_lambda_.1} parent=1 // pred_check
      _
    $region15: #{_lambda_.1} parent=1 // pred_check_branch
      %20 = sbr.rel (0) target = $region17
    $region16: #{_lambda_.1} parent=1 // pred_region
      _
    $region17: #{_lambda_.1} parent=1 // pred_fallthru
      _
    // Predicated region
    $region18: #{_lambda_.1} parent=1 // pred_check
      _
    $region19: #{_lambda_.1} parent=1 // pred_check_branch
      %22 = sbr.rel (0) target = $region21
    $region20: #{_lambda_.1} parent=1 // pred_region
      _
    $region21: #{_lambda_.1} parent=1 // pred_fallthru
      _
    // Predicated region
    $region22: #{_lambda_.1} parent=1 // pred_check
      _
    $region23: #{_lambda_.1} parent=1 // pred_check_branch
      %24 = sbr.rel (0) target = $region25
    $region24: #{_lambda_.1} parent=1 // pred_region
      _
    $region25: #{_lambda_.1} parent=1 // pred_fallthru
      _
    // Predicated region
    $region26: #{_lambda_.1} parent=1 // pred_check
      _
    $region27: #{_lambda_.1} parent=1 // pred_check_branch
      %26 = sbr.rel (0) target = $region29
    $region28: #{_lambda_.1} parent=1 // pred_region
      _
    $region29: #{_lambda_.1} parent=1 // pred_fallthru
      _
    %v27 = vld [vmem:[%s0] sm:$0xff]
    %v28 = vld [vmem:[%s0 + $0x8] sm:$0xff]
    %v29 = vld [vmem:[%s0 + $0x10] sm:$0xff]
    %v30 = vld [vmem:[%s0 + $0x18] sm:$0xff]
    %v31 = vld [vmem:[%s0 + $0x20] sm:$0xff]
    %v32 = vld [vmem:[%s1] sm:$0xff]
    %v33 = vld [vmem:[%s1 + $0x8] sm:$0xff]
    %v34 = vld [vmem:[%s0 + $0x1] sm:$0xff]
    %v35 = vld [vmem:[%s0 + $0x9] sm:$0xff]
    %v36 = vld [vmem:[%s0 + $0x11] sm:$0xff]
    %v37 = vld [vmem:[%s0 + $0x19] sm:$0xff]
    %v38 = vld [vmem:[%s0 + $0x21] sm:$0xff]
    %s39 = scalar_lea.vmem %s1, 16
    %v40 = vld [vmem:[%s39] sm:$0xff]
    %v41 = vld [vmem:[%s39 + $0x8] sm:$0xff]
    %vm42 = vcmask 130048
    %v44 = vsel %vm42, %v34, 0
    %v47 = vsel %vm42, %v35, 0
    %v50 = vsel %vm42, %v36, 0
    %v53 = vsel %vm42, %v37, 0
    %v56 = vsel %vm42, %v38, 0
    %58 = vmatprep.subr.mxu0 0.0
    %59 = vmatpush1.msra.mxu0 %v40
    %60 = vmatprep.subr.mxu0 0.0
    %61 = vmatpush1.msra.mxu0 %v41
    %62 = vmatprep.subr.mxu0 0.0
    %63 = vmatpush1.msra.mxu0 0.0
    %64 = vmatprep.subr.mxu0 0.0
    %65 = vmatpush1.msra.mxu0 0.0
    %66 = vmatprep.subr.mxu0 0.0
    %67 = vmatpush1.msra.mxu0 0.0
    %68 = vmatprep.subr.mxu0 0.0
    %69 = vmatpush1.msra.mxu0 0.0
    %70 = vmatprep.subr.mxu0 0.0
    %71 = vmatpush1.msra.mxu0 0.0
    %72 = vmatprep.subr.mxu0 0.0
    %73 = vmatpush1.msra.mxu0 0.0
    %74 = vmatprep.subr.mxu0 0.0
    %75 = vmatpush1.msra.mxu0 0.0
    %76 = vmatprep.subr.mxu0 0.0
    %77 = vmatpush1.msra.mxu0 0.0
    %78 = vmatprep.subr.mxu0 0.0
    %79 = vmatpush1.msra.mxu0 0.0
    %80 = vmatprep.subr.mxu0 0.0
    %81 = vmatpush1.msra.mxu0 0.0
    %82 = vmatprep.subr.mxu0 0.0
    %83 = vmatpush1.msra.mxu0 0.0
    %84 = vmatprep.subr.mxu0 0.0
    %85 = vmatpush1.msra.mxu0 0.0
    %86 = vmatprep.subr.mxu0 0.0
    %87 = vmatpush1.msra.mxu0 0.0
    %88 = vmatprep.subr.mxu0 0.0
    %89 = vmatpush1.msra.mxu0 0.0
    %90 = vmatprep.subr.mxu0 0.0
    %91 = vmatpush1.msra.mxu0 0.0
    %92 = vmatprep.subr.mxu0 0.0
    %93 = vmatpush1.msra.mxu0 0.0
    %94 = vmatprep.subr.mxu0 0.0
    %95 = vmatpush1.msra.mxu0 0.0
    %96 = vmatprep.subr.mxu0 0.0
    %97 = vmatpush1.msra.mxu0 0.0
    %98 = vmatprep.subr.mxu0 0.0
    %99 = vmatpush1.msra.mxu0 0.0
    %100 = vmatprep.subr.mxu0 0.0
    %101 = vmatpush1.msra.mxu0 0.0
    %102 = vmatprep.subr.mxu0 0.0
    %103 = vmatpush1.msra.mxu0 0.0
    %104 = vmatprep.subr.mxu0 0.0
    %105 = vmatpush1.msra.mxu0 0.0
    %106 = vmatprep.subr.mxu0 0.0
    %107 = vmatpush1.msra.mxu0 0.0
    %108 = vmatprep.subr.mxu0 0.0
    %109 = vmatpush1.msra.mxu0 0.0
    %110 = vmatprep.subr.mxu0 0.0
    %111 = vmatpush1.msra.mxu0 0.0
    %112 = vmatprep.subr.mxu0 0.0
    %113 = vmatpush1.msra.mxu0 0.0
    %114 = vmatprep.subr.mxu0 0.0
    %115 = vmatpush1.msra.mxu0 0.0
    %116 = vmatprep.subr.mxu0 0.0
    %117 = vmatpush1.msra.mxu0 0.0
    %118 = vmatprep.subr.mxu0 0.0
    %119 = vmatpush1.msra.mxu0 0.0
    %120 = vmatprep.subr.mxu0 0.0
    %121 = vmatpush1.msra.mxu0 0.0
    %122 = vmatprep.mubr.f32.mxu0 0.0
    %123 = vmatmul.mubr.f32.gmra.mrb[0].mxu0 %v44
    %v124 = vpop.f32.mrb[0].mxu0
    %v125 = vadd.f32 0.0, %v124
    %v126 = vpop.f32.mrb[0].mxu0
    %127 = vmatprep.mubr.f32.mxu0 0.0
    %128 = vmatmul.mubr.f32.gmra.mrb[0].mxu0 %v47
    %v129 = vpop.f32.mrb[0].mxu0
    %v130 = vadd.f32 0.0, %v129
    %v131 = vpop.f32.mrb[0].mxu0
    %132 = vmatprep.mubr.f32.mxu0 0.0
    %133 = vmatmul.mubr.f32.gmra.mrb[0].mxu0 %v50
    %v134 = vpop.f32.mrb[0].mxu0
    %v135 = vpop.f32.mrb[0].mxu0
    %136 = vmatprep.mubr.f32.mxu0 0.0
    %137 = vmatmul.mubr.f32.gmra.mrb[0].mxu0 %v53
    %v138 = vpop.f32.mrb[0].mxu0
    %v139 = vadd.f32 0.0, %v138
    %v140 = vpop.f32.mrb[0].mxu0
    %141 = vmatprep.mubr.f32.mxu0 0.0
    %142 = vmatmul.mubr.f32.gmra.mrb[0].mxu0 %v56
    %v143 = vpop.f32.mrb[0].mxu0
    %v144 = vadd.f32 0.0, %v143
    %v145 = vpop.f32.mrb[0].mxu0
    %146 = vdwg.mxu0
    %v148 = vsel %vm42, %v27, 0
    %v151 = vsel %vm42, %v28, 0
    %v154 = vsel %vm42, %v29, 0
    %v157 = vsel %vm42, %v30, 0
    %v160 = vsel %vm42, %v31, 0
    %162 = vmatprep.subr.mxu0 0.0
    %163 = vmatpush1.msra.mxu0 %v32
    %164 = vmatprep.subr.mxu0 0.0
    %165 = vmatpush1.msra.mxu0 %v33
    %166 = vmatprep.subr.mxu0 0.0
    %167 = vmatpush1.msra.mxu0 0.0
    %168 = vmatprep.subr.mxu0 0.0
    %169 = vmatpush1.msra.mxu0 0.0
    %170 = vmatprep.subr.mxu0 0.0
    %171 = vmatpush1.msra.mxu0 0.0
    %172 = vmatprep.subr.mxu0 0.0
    %173 = vmatpush1.msra.mxu0 0.0
    %174 = vmatprep.subr.mxu0 0.0
    %175 = vmatpush1.msra.mxu0 0.0
    %176 = vmatprep.subr.mxu0 0.0
    %177 = vmatpush1.msra.mxu0 0.0
    %178 = vmatprep.subr.mxu0 0.0
    %179 = vmatpush1.msra.mxu0 0.0
    %180 = vmatprep.subr.mxu0 0.0
    %181 = vmatpush1.msra.mxu0 0.0
    %182 = vmatprep.subr.mxu0 0.0
    %183 = vmatpush1.msra.mxu0 0.0
    %184 = vmatprep.subr.mxu0 0.0
    %185 = vmatpush1.msra.mxu0 0.0
    %186 = vmatprep.subr.mxu0 0.0
    %187 = vmatpush1.msra.mxu0 0.0
    %188 = vmatprep.subr.mxu0 0.0
    %189 = vmatpush1.msra.mxu0 0.0
    %190 = vmatprep.subr.mxu0 0.0
    %191 = vmatpush1.msra.mxu0 0.0
    %192 = vmatprep.subr.mxu0 0.0
    %193 = vmatpush1.msra.mxu0 0.0
    %194 = vmatprep.subr.mxu0 0.0
    %195 = vmatpush1.msra.mxu0 0.0
    %196 = vmatprep.subr.mxu0 0.0
    %197 = vmatpush1.msra.mxu0 0.0
    %198 = vmatprep.subr.mxu0 0.0
    %199 = vmatpush1.msra.mxu0 0.0
    %200 = vmatprep.subr.mxu0 0.0
    %201 = vmatpush1.msra.mxu0 0.0
    %202 = vmatprep.subr.mxu0 0.0
    %203 = vmatpush1.msra.mxu0 0.0
    %204 = vmatprep.subr.mxu0 0.0
    %205 = vmatpush1.msra.mxu0 0.0
    %206 = vmatprep.subr.mxu0 0.0
    %207 = vmatpush1.msra.mxu0 0.0
    %208 = vmatprep.subr.mxu0 0.0
    %209 = vmatpush1.msra.mxu0 0.0
    %210 = vmatprep.subr.mxu0 0.0
    %211 = vmatpush1.msra.mxu0 0.0
    %212 = vmatprep.subr.mxu0 0.0
    %213 = vmatpush1.msra.mxu0 0.0
    %214 = vmatprep.subr.mxu0 0.0
    %215 = vmatpush1.msra.mxu0 0.0
    %216 = vmatprep.subr.mxu0 0.0
    %217 = vmatpush1.msra.mxu0 0.0
    %218 = vmatprep.subr.mxu0 0.0
    %219 = vmatpush1.msra.mxu0 0.0
    %220 = vmatprep.subr.mxu0 0.0
    %221 = vmatpush1.msra.mxu0 0.0
    %222 = vmatprep.subr.mxu0 0.0
    %223 = vmatpush1.msra.mxu0 0.0
    %224 = vmatprep.subr.mxu0 0.0
    %225 = vmatpush1.msra.mxu0 0.0
    %226 = vmatprep.mubr.f32.mxu0 0.0
    %227 = vmatmul.mubr.f32.gmra.mrb[0].mxu0 %v148
    %v228 = vpop.f32.mrb[0].mxu0
    %v229 = vadd.f32 %v125, %v228
    %v230 = vpop.f32.mrb[0].mxu0
    %231 = vmatprep.mubr.f32.mxu0 0.0
    %232 = vmatmul.mubr.f32.gmra.mrb[0].mxu0 %v151
    %v233 = vpop.f32.mrb[0].mxu0
    %v234 = vadd.f32 %v130, %v233
    %v235 = vpop.f32.mrb[0].mxu0
    %236 = vmatprep.mubr.f32.mxu0 0.0
    %237 = vmatmul.mubr.f32.gmra.mrb[0].mxu0 %v154
    %v238 = vpop.f32.mrb[0].mxu0
    %v239 = vpop.f32.mrb[0].mxu0
    %240 = vmatprep.mubr.f32.mxu0 0.0
    %241 = vmatmul.mubr.f32.gmra.mrb[0].mxu0 %v157
    %v242 = vpop.f32.mrb[0].mxu0
    %v243 = vadd.f32 %v139, %v242
    %v244 = vpop.f32.mrb[0].mxu0
    %245 = vmatprep.mubr.f32.mxu0 0.0
    %246 = vmatmul.mubr.f32.gmra.mrb[0].mxu0 %v160
    %v247 = vpop.f32.mrb[0].mxu0
    %v248 = vadd.f32 %v144, %v247
    %v249 = vpop.f32.mrb[0].mxu0
    %250 = vdwg.mxu0
    %v251 = vld [vmem:[%s0 + $0x2] sm:$0xff]
    %v252 = vld [vmem:[%s0 + $0xa] sm:$0xff]
    %v253 = vld [vmem:[%s0 + $0x12] sm:$0xff]
    %v254 = vld [vmem:[%s0 + $0x1a] sm:$0xff]
    %v255 = vld [vmem:[%s0 + $0x22] sm:$0xff]
    %s256 = scalar_lea.vmem %s1, 32
    %v257 = vld [vmem:[%s256] sm:$0xff]
    %v258 = vld [vmem:[%s256 + $0x8] sm:$0xff]
    %v260 = vsel %vm42, %v251, 0
    %v263 = vsel %vm42, %v252, 0
    %v266 = vsel %vm42, %v253, 0
    %v269 = vsel %vm42, %v254, 0
    %v272 = vsel %vm42, %v255, 0
    %274 = vmatprep.subr.mxu0 0.0
    %275 = vmatpush1.msra.mxu0 %v257
    %276 = vmatprep.subr.mxu0 0.0
    %277 = vmatpush1.msra.mxu0 %v258
    %278 = vmatprep.subr.mxu0 0.0
    %279 = vmatpush1.msra.mxu0 0.0
    %280 = vmatprep.subr.mxu0 0.0
    %281 = vmatpush1.msra.mxu0 0.0
    %282 = vmatprep.subr.mxu0 0.0
    %283 = vmatpush1.msra.mxu0 0.0
    %284 = vmatprep.subr.mxu0 0.0
    %285 = vmatpush1.msra.mxu0 0.0
    %286 = vmatprep.subr.mxu0 0.0
    %287 = vmatpush1.msra.mxu0 0.0
    %288 = vmatprep.subr.mxu0 0.0
    %289 = vmatpush1.msra.mxu0 0.0
    %290 = vmatprep.subr.mxu0 0.0
    %291 = vmatpush1.msra.mxu0 0.0
    %292 = vmatprep.subr.mxu0 0.0
    %293 = vmatpush1.msra.mxu0 0.0
    %294 = vmatprep.subr.mxu0 0.0
    %295 = vmatpush1.msra.mxu0 0.0
    %296 = vmatprep.subr.mxu0 0.0
    %297 = vmatpush1.msra.mxu0 0.0
    %298 = vmatprep.subr.mxu0 0.0
    %299 = vmatpush1.msra.mxu0 0.0
    %300 = vmatprep.subr.mxu0 0.0
    %301 = vmatpush1.msra.mxu0 0.0
    %302 = vmatprep.subr.mxu0 0.0
    %303 = vmatpush1.msra.mxu0 0.0
    %304 = vmatprep.subr.mxu0 0.0
    %305 = vmatpush1.msra.mxu0 0.0
    %306 = vmatprep.subr.mxu0 0.0
    %307 = vmatpush1.msra.mxu0 0.0
    %308 = vmatprep.subr.mxu0 0.0
    %309 = vmatpush1.msra.mxu0 0.0
    %310 = vmatprep.subr.mxu0 0.0
    %311 = vmatpush1.msra.mxu0 0.0
    %312 = vmatprep.subr.mxu0 0.0
    %313 = vmatpush1.msra.mxu0 0.0
    %314 = vmatprep.subr.mxu0 0.0
    %315 = vmatpush1.msra.mxu0 0.0
    %316 = vmatprep.subr.mxu0 0.0
    %317 = vmatpush1.msra.mxu0 0.0
    %318 = vmatprep.subr.mxu0 0.0
    %319 = vmatpush1.msra.mxu0 0.0
    %320 = vmatprep.subr.mxu0 0.0
    %321 = vmatpush1.msra.mxu0 0.0
    %322 = vmatprep.subr.mxu0 0.0
    %323 = vmatpush1.msra.mxu0 0.0
    %324 = vmatprep.subr.mxu0 0.0
    %325 = vmatpush1.msra.mxu0 0.0
    %326 = vmatprep.subr.mxu0 0.0
    %327 = vmatpush1.msra.mxu0 0.0
    %328 = vmatprep.subr.mxu0 0.0
    %329 = vmatpush1.msra.mxu0 0.0
    %330 = vmatprep.subr.mxu0 0.0
    %331 = vmatpush1.msra.mxu0 0.0
    %332 = vmatprep.subr.mxu0 0.0
    %333 = vmatpush1.msra.mxu0 0.0
    %334 = vmatprep.subr.mxu0 0.0
    %335 = vmatpush1.msra.mxu0 0.0
    %336 = vmatprep.subr.mxu0 0.0
    %337 = vmatpush1.msra.mxu0 0.0
    %338 = vmatprep.mubr.f32.mxu0 0.0
    %339 = vmatmul.mubr.f32.gmra.mrb[0].mxu0 %v260
    %v340 = vpop.f32.mrb[0].mxu0
    %v341 = vadd.f32 0.0, %v340
    %v342 = vpop.f32.mrb[0].mxu0
    %343 = vmatprep.mubr.f32.mxu0 0.0
    %344 = vmatmul.mubr.f32.gmra.mrb[0].mxu0 %v263
    %v345 = vpop.f32.mrb[0].mxu0
    %v346 = vadd.f32 0.0, %v345
    %v347 = vpop.f32.mrb[0].mxu0
    %348 = vmatprep.mubr.f32.mxu0 0.0
    %349 = vmatmul.mubr.f32.gmra.mrb[0].mxu0 %v266
    %v350 = vpop.f32.mrb[0].mxu0
    %v351 = vpop.f32.mrb[0].mxu0
    %352 = vmatprep.mubr.f32.mxu0 0.0
    %353 = vmatmul.mubr.f32.gmra.mrb[0].mxu0 %v269
    %v354 = vpop.f32.mrb[0].mxu0
    %v355 = vadd.f32 0.0, %v354
    %v356 = vpop.f32.mrb[0].mxu0
    %357 = vmatprep.mubr.f32.mxu0 0.0
    %358 = vmatmul.mubr.f32.gmra.mrb[0].mxu0 %v272
    %v359 = vpop.f32.mrb[0].mxu0
    %v360 = vadd.f32 0.0, %v359
    %v361 = vpop.f32.mrb[0].mxu0
    %362 = vdwg.mxu0
    %v363 = vadd.f32 %v229, %v341
    %v364 = vadd.f32 %v234, %v346
    %v365 = vadd.f32 %v243, %v355
    %v366 = vadd.f32 %v248, %v360
    %v367 = vld [vmem:[%s0 + $0x3] sm:$0xff]
    %v368 = vld [vmem:[%s0 + $0xb] sm:$0xff]
    %v369 = vld [vmem:[%s0 + $0x13] sm:$0xff]
    %v370 = vld [vmem:[%s0 + $0x1b] sm:$0xff]
    %v371 = vld [vmem:[%s0 + $0x23] sm:$0xff]
    %s372 = scalar_lea.vmem %s1, 48
    %v373 = vld [vmem:[%s372] sm:$0xff]
    %v374 = vld [vmem:[%s372 + $0x8] sm:$0xff]
    %v376 = vsel %vm42, %v367, 0
    %v379 = vsel %vm42, %v368, 0
    %v382 = vsel %vm42, %v369, 0
    %v385 = vsel %vm42, %v370, 0
    %v388 = vsel %vm42, %v371, 0
    %390 = vmatprep.subr.mxu0 0.0
    %391 = vmatpush1.msra.mxu0 %v373
    %392 = vmatprep.subr.mxu0 0.0
    %393 = vmatpush1.msra.mxu0 %v374
    %394 = vmatprep.subr.mxu0 0.0
    %395 = vmatpush1.msra.mxu0 0.0
    %396 = vmatprep.subr.mxu0 0.0
    %397 = vmatpush1.msra.mxu0 0.0
    %398 = vmatprep.subr.mxu0 0.0
    %399 = vmatpush1.msra.mxu0 0.0
    %400 = vmatprep.subr.mxu0 0.0
    %401 = vmatpush1.msra.mxu0 0.0
    %402 = vmatprep.subr.mxu0 0.0
    %403 = vmatpush1.msra.mxu0 0.0
    %404 = vmatprep.subr.mxu0 0.0
    %405 = vmatpush1.msra.mxu0 0.0
    %406 = vmatprep.subr.mxu0 0.0
    %407 = vmatpush1.msra.mxu0 0.0
    %408 = vmatprep.subr.mxu0 0.0
    %409 = vmatpush1.msra.mxu0 0.0
    %410 = vmatprep.subr.mxu0 0.0
    %411 = vmatpush1.msra.mxu0 0.0
    %412 = vmatprep.subr.mxu0 0.0
    %413 = vmatpush1.msra.mxu0 0.0
    %414 = vmatprep.subr.mxu0 0.0
    %415 = vmatpush1.msra.mxu0 0.0
    %416 = vmatprep.subr.mxu0 0.0
    %417 = vmatpush1.msra.mxu0 0.0
    %418 = vmatprep.subr.mxu0 0.0
    %419 = vmatpush1.msra.mxu0 0.0
    %420 = vmatprep.subr.mxu0 0.0
    %421 = vmatpush1.msra.mxu0 0.0
    %422 = vmatprep.subr.mxu0 0.0
    %423 = vmatpush1.msra.mxu0 0.0
    %424 = vmatprep.subr.mxu0 0.0
    %425 = vmatpush1.msra.mxu0 0.0
    %426 = vmatprep.subr.mxu0 0.0
    %427 = vmatpush1.msra.mxu0 0.0
    %428 = vmatprep.subr.mxu0 0.0
    %429 = vmatpush1.msra.mxu0 0.0
    %430 = vmatprep.subr.mxu0 0.0
    %431 = vmatpush1.msra.mxu0 0.0
    %432 = vmatprep.subr.mxu0 0.0
    %433 = vmatpush1.msra.mxu0 0.0
    %434 = vmatprep.subr.mxu0 0.0
    %435 = vmatpush1.msra.mxu0 0.0
    %436 = vmatprep.subr.mxu0 0.0
    %437 = vmatpush1.msra.mxu0 0.0
    %438 = vmatprep.subr.mxu0 0.0
    %439 = vmatpush1.msra.mxu0 0.0
    %440 = vmatprep.subr.mxu0 0.0
    %441 = vmatpush1.msra.mxu0 0.0
    %442 = vmatprep.subr.mxu0 0.0
    %443 = vmatpush1.msra.mxu0 0.0
    %444 = vmatprep.subr.mxu0 0.0
    %445 = vmatpush1.msra.mxu0 0.0
    %446 = vmatprep.subr.mxu0 0.0
    %447 = vmatpush1.msra.mxu0 0.0
    %448 = vmatprep.subr.mxu0 0.0
    %449 = vmatpush1.msra.mxu0 0.0
    %450 = vmatprep.subr.mxu0 0.0
    %451 = vmatpush1.msra.mxu0 0.0
    %452 = vmatprep.subr.mxu0 0.0
    %453 = vmatpush1.msra.mxu0 0.0
    %454 = vmatprep.mubr.f32.mxu0 0.0
    %455 = vmatmul.mubr.f32.gmra.mrb[0].mxu0 %v376
    %v456 = vpop.f32.mrb[0].mxu0
    %v457 = vadd.f32 0.0, %v456
    %v458 = vpop.f32.mrb[0].mxu0
    %459 = vmatprep.mubr.f32.mxu0 0.0
    %460 = vmatmul.mubr.f32.gmra.mrb[0].mxu0 %v379
    %v461 = vpop.f32.mrb[0].mxu0
    %v462 = vadd.f32 0.0, %v461
    %v463 = vpop.f32.mrb[0].mxu0
    %464 = vmatprep.mubr.f32.mxu0 0.0
    %465 = vmatmul.mubr.f32.gmra.mrb[0].mxu0 %v382
    %v466 = vpop.f32.mrb[0].mxu0
    %v467 = vpop.f32.mrb[0].mxu0
    %468 = vmatprep.mubr.f32.mxu0 0.0
    %469 = vmatmul.mubr.f32.gmra.mrb[0].mxu0 %v385
    %v470 = vpop.f32.mrb[0].mxu0
    %v471 = vadd.f32 0.0, %v470
    %v472 = vpop.f32.mrb[0].mxu0
    %473 = vmatprep.mubr.f32.mxu0 0.0
    %474 = vmatmul.mubr.f32.gmra.mrb[0].mxu0 %v388
    %v475 = vpop.f32.mrb[0].mxu0
    %v476 = vadd.f32 0.0, %v475
    %v477 = vpop.f32.mrb[0].mxu0
    %478 = vdwg.mxu0
    %v479 = vadd.f32 %v363, %v457
    %v480 = vadd.f32 %v364, %v462
    %v481 = vadd.f32 %v365, %v471
    %v482 = vadd.f32 %v366, %v476
    %v483 = vld [vmem:[%s0 + $0x4] sm:$0xff]
    %v484 = vld [vmem:[%s0 + $0xc] sm:$0xff]
    %v485 = vld [vmem:[%s0 + $0x14] sm:$0xff]
    %v486 = vld [vmem:[%s0 + $0x1c] sm:$0xff]
    %v487 = vld [vmem:[%s0 + $0x24] sm:$0xff]
    %s488 = scalar_lea.vmem %s1, 64
    %v489 = vld [vmem:[%s488] sm:$0xff]
    %v490 = vld [vmem:[%s488 + $0x8] sm:$0xff]
    %v492 = vsel %vm42, %v483, 0
    %v495 = vsel %vm42, %v484, 0
    %v498 = vsel %vm42, %v485, 0
    %v501 = vsel %vm42, %v486, 0
    %v504 = vsel %vm42, %v487, 0
    %506 = vmatprep.subr.mxu0 0.0
    %507 = vmatpush1.msra.mxu0 %v489
    %508 = vmatprep.subr.mxu0 0.0
    %509 = vmatpush1.msra.mxu0 %v490
    %510 = vmatprep.subr.mxu0 0.0
    %511 = vmatpush1.msra.mxu0 0.0
    %512 = vmatprep.subr.mxu0 0.0
    %513 = vmatpush1.msra.mxu0 0.0
    %514 = vmatprep.subr.mxu0 0.0
    %515 = vmatpush1.msra.mxu0 0.0
    %516 = vmatprep.subr.mxu0 0.0
    %517 = vmatpush1.msra.mxu0 0.0
    %518 = vmatprep.subr.mxu0 0.0
    %519 = vmatpush1.msra.mxu0 0.0
    %520 = vmatprep.subr.mxu0 0.0
    %521 = vmatpush1.msra.mxu0 0.0
    %522 = vmatprep.subr.mxu0 0.0
    %523 = vmatpush1.msra.mxu0 0.0
    %524 = vmatprep.subr.mxu0 0.0
    %525 = vmatpush1.msra.mxu0 0.0
    %526 = vmatprep.subr.mxu0 0.0
    %527 = vmatpush1.msra.mxu0 0.0
    %528 = vmatprep.subr.mxu0 0.0
    %529 = vmatpush1.msra.mxu0 0.0
    %530 = vmatprep.subr.mxu0 0.0
    %531 = vmatpush1.msra.mxu0 0.0
    %532 = vmatprep.subr.mxu0 0.0
    %533 = vmatpush1.msra.mxu0 0.0
    %534 = vmatprep.subr.mxu0 0.0
    %535 = vmatpush1.msra.mxu0 0.0
    %536 = vmatprep.subr.mxu0 0.0
    %537 = vmatpush1.msra.mxu0 0.0
    %538 = vmatprep.subr.mxu0 0.0
    %539 = vmatpush1.msra.mxu0 0.0
    %540 = vmatprep.subr.mxu0 0.0
    %541 = vmatpush1.msra.mxu0 0.0
    %542 = vmatprep.subr.mxu0 0.0
    %543 = vmatpush1.msra.mxu0 0.0
    %544 = vmatprep.subr.mxu0 0.0
    %545 = vmatpush1.msra.mxu0 0.0
    %546 = vmatprep.subr.mxu0 0.0
    %547 = vmatpush1.msra.mxu0 0.0
    %548 = vmatprep.subr.mxu0 0.0
    %549 = vmatpush1.msra.mxu0 0.0
    %550 = vmatprep.subr.mxu0 0.0
    %551 = vmatpush1.msra.mxu0 0.0
    %552 = vmatprep.subr.mxu0 0.0
    %553 = vmatpush1.msra.mxu0 0.0
    %554 = vmatprep.subr.mxu0 0.0
    %555 = vmatpush1.msra.mxu0 0.0
    %556 = vmatprep.subr.mxu0 0.0
    %557 = vmatpush1.msra.mxu0 0.0
    %558 = vmatprep.subr.mxu0 0.0
    %559 = vmatpush1.msra.mxu0 0.0
    %560 = vmatprep.subr.mxu0 0.0
    %561 = vmatpush1.msra.mxu0 0.0
    %562 = vmatprep.subr.mxu0 0.0
    %563 = vmatpush1.msra.mxu0 0.0
    %564 = vmatprep.subr.mxu0 0.0
    %565 = vmatpush1.msra.mxu0 0.0
    %566 = vmatprep.subr.mxu0 0.0
    %567 = vmatpush1.msra.mxu0 0.0
    %568 = vmatprep.subr.mxu0 0.0
    %569 = vmatpush1.msra.mxu0 0.0
    %570 = vmatprep.mubr.f32.mxu0 0.0
    %571 = vmatmul.mubr.f32.gmra.mrb[0].mxu0 %v492
    %v572 = vpop.f32.mrb[0].mxu0
    %v573 = vadd.f32 0.0, %v572
    %v574 = vpop.f32.mrb[0].mxu0
    %575 = vmatprep.mubr.f32.mxu0 0.0
    %576 = vmatmul.mubr.f32.gmra.mrb[0].mxu0 %v495
    %v577 = vpop.f32.mrb[0].mxu0
    %v578 = vadd.f32 0.0, %v577
    %v579 = vpop.f32.mrb[0].mxu0
    %580 = vmatprep.mubr.f32.mxu0 0.0
    %581 = vmatmul.mubr.f32.gmra.mrb[0].mxu0 %v498
    %v582 = vpop.f32.mrb[0].mxu0
    %v583 = vpop.f32.mrb[0].mxu0
    %584 = vmatprep.mubr.f32.mxu0 0.0
    %585 = vmatmul.mubr.f32.gmra.mrb[0].mxu0 %v501
    %v586 = vpop.f32.mrb[0].mxu0
    %v587 = vadd.f32 0.0, %v586
    %v588 = vpop.f32.mrb[0].mxu0
    %589 = vmatprep.mubr.f32.mxu0 0.0
    %590 = vmatmul.mubr.f32.gmra.mrb[0].mxu0 %v504
    %v591 = vpop.f32.mrb[0].mxu0
    %v592 = vadd.f32 0.0, %v591
    %v593 = vpop.f32.mrb[0].mxu0
    %594 = vdwg.mxu0
    %v595 = vadd.f32 %v479, %v573
    %v596 = vadd.f32 %v480, %v578
    %v597 = vadd.f32 %v481, %v587
    %v598 = vadd.f32 %v482, %v592
    %v599 = vld [vmem:[%s0 + $0x5] sm:$0xff]
    %v600 = vld [vmem:[%s0 + $0xd] sm:$0xff]
    %v601 = vld [vmem:[%s0 + $0x15] sm:$0xff]
    %v602 = vld [vmem:[%s0 + $0x1d] sm:$0xff]
    %v603 = vld [vmem:[%s0 + $0x25] sm:$0xff]
    %s604 = scalar_lea.vmem %s1, 80
    %v605 = vld [vmem:[%s604] sm:$0xff]
    %v606 = vld [vmem:[%s604 + $0x8] sm:$0xff]
    %v608 = vsel %vm42, %v599, 0
    %v611 = vsel %vm42, %v600, 0
    %v614 = vsel %vm42, %v601, 0
    %v617 = vsel %vm42, %v602, 0
    %v620 = vsel %vm42, %v603, 0
    %622 = vmatprep.subr.mxu0 0.0
    %623 = vmatpush1.msra.mxu0 %v605
    %624 = vmatprep.subr.mxu0 0.0
    %625 = vmatpush1.msra.mxu0 %v606
    %626 = vmatprep.subr.mxu0 0.0
    %627 = vmatpush1.msra.mxu0 0.0
    %628 = vmatprep.subr.mxu0 0.0
    %629 = vmatpush1.msra.mxu0 0.0
    %630 = vmatprep.subr.mxu0 0.0
    %631 = vmatpush1.msra.mxu0 0.0
    %632 = vmatprep.subr.mxu0 0.0
    %633 = vmatpush1.msra.mxu0 0.0
    %634 = vmatprep.subr.mxu0 0.0
    %635 = vmatpush1.msra.mxu0 0.0
    %636 = vmatprep.subr.mxu0 0.0
    %637 = vmatpush1.msra.mxu0 0.0
    %638 = vmatprep.subr.mxu0 0.0
    %639 = vmatpush1.msra.mxu0 0.0
    %640 = vmatprep.subr.mxu0 0.0
    %641 = vmatpush1.msra.mxu0 0.0
    %642 = vmatprep.subr.mxu0 0.0
    %643 = vmatpush1.msra.mxu0 0.0
    %644 = vmatprep.subr.mxu0 0.0
    %645 = vmatpush1.msra.mxu0 0.0
    %646 = vmatprep.subr.mxu0 0.0
    %647 = vmatpush1.msra.mxu0 0.0
    %648 = vmatprep.subr.mxu0 0.0
    %649 = vmatpush1.msra.mxu0 0.0
    %650 = vmatprep.subr.mxu0 0.0
    %651 = vmatpush1.msra.mxu0 0.0
    %652 = vmatprep.subr.mxu0 0.0
    %653 = vmatpush1.msra.mxu0 0.0
    %654 = vmatprep.subr.mxu0 0.0
    %655 = vmatpush1.msra.mxu0 0.0
    %656 = vmatprep.subr.mxu0 0.0
    %657 = vmatpush1.msra.mxu0 0.0
    %658 = vmatprep.subr.mxu0 0.0
    %659 = vmatpush1.msra.mxu0 0.0
    %660 = vmatprep.subr.mxu0 0.0
    %661 = vmatpush1.msra.mxu0 0.0
    %662 = vmatprep.subr.mxu0 0.0
    %663 = vmatpush1.msra.mxu0 0.0
    %664 = vmatprep.subr.mxu0 0.0
    %665 = vmatpush1.msra.mxu0 0.0
    %666 = vmatprep.subr.mxu0 0.0
    %667 = vmatpush1.msra.mxu0 0.0
    %668 = vmatprep.subr.mxu0 0.0
    %669 = vmatpush1.msra.mxu0 0.0
    %670 = vmatprep.subr.mxu0 0.0
    %671 = vmatpush1.msra.mxu0 0.0
    %672 = vmatprep.subr.mxu0 0.0
    %673 = vmatpush1.msra.mxu0 0.0
    %674 = vmatprep.subr.mxu0 0.0
    %675 = vmatpush1.msra.mxu0 0.0
    %676 = vmatprep.subr.mxu0 0.0
    %677 = vmatpush1.msra.mxu0 0.0
    %678 = vmatprep.subr.mxu0 0.0
    %679 = vmatpush1.msra.mxu0 0.0
    %680 = vmatprep.subr.mxu0 0.0
    %681 = vmatpush1.msra.mxu0 0.0
    %682 = vmatprep.subr.mxu0 0.0
    %683 = vmatpush1.msra.mxu0 0.0
    %684 = vmatprep.subr.mxu0 0.0
    %685 = vmatpush1.msra.mxu0 0.0
    %686 = vmatprep.mubr.f32.mxu0 0.0
    %687 = vmatmul.mubr.f32.gmra.mrb[0].mxu0 %v608
    %v688 = vpop.f32.mrb[0].mxu0
    %v689 = vadd.f32 0.0, %v688
    %v690 = vpop.f32.mrb[0].mxu0
    %691 = vmatprep.mubr.f32.mxu0 0.0
    %692 = vmatmul.mubr.f32.gmra.mrb[0].mxu0 %v611
    %v693 = vpop.f32.mrb[0].mxu0
    %v694 = vadd.f32 0.0, %v693
    %v695 = vpop.f32.mrb[0].mxu0
    %696 = vmatprep.mubr.f32.mxu0 0.0
    %697 = vmatmul.mubr.f32.gmra.mrb[0].mxu0 %v614
    %v698 = vpop.f32.mrb[0].mxu0
    %v699 = vpop.f32.mrb[0].mxu0
    %700 = vmatprep.mubr.f32.mxu0 0.0
    %701 = vmatmul.mubr.f32.gmra.mrb[0].mxu0 %v617
    %v702 = vpop.f32.mrb[0].mxu0
    %v703 = vadd.f32 0.0, %v702
    %v704 = vpop.f32.mrb[0].mxu0
    %705 = vmatprep.mubr.f32.mxu0 0.0
    %706 = vmatmul.mubr.f32.gmra.mrb[0].mxu0 %v620
    %v707 = vpop.f32.mrb[0].mxu0
    %v708 = vadd.f32 0.0, %v707
    %v709 = vpop.f32.mrb[0].mxu0
    %710 = vdwg.mxu0
    %v711 = vadd.f32 %v595, %v689
    %v712 = vadd.f32 %v596, %v694
    %v713 = vadd.f32 %v597, %v703
    %v714 = vadd.f32 %v598, %v708
    %v715 = vld [vmem:[%s0 + $0x6] sm:$0xff]
    %v716 = vld [vmem:[%s0 + $0xe] sm:$0xff]
    %v717 = vld [vmem:[%s0 + $0x16] sm:$0xff]
    %v718 = vld [vmem:[%s0 + $0x1e] sm:$0xff]
    %v719 = vld [vmem:[%s0 + $0x26] sm:$0xff]
    %s720 = scalar_lea.vmem %s1, 96
    %v721 = vld [vmem:[%s720] sm:$0xff]
    %v722 = vld [vmem:[%s720 + $0x8] sm:$0xff]
    %v724 = vsel %vm42, %v715, 0
    %v727 = vsel %vm42, %v716, 0
    %v730 = vsel %vm42, %v717, 0
    %v733 = vsel %vm42, %v718, 0
    %v736 = vsel %vm42, %v719, 0
    %738 = vmatprep.subr.mxu0 0.0
    %739 = vmatpush1.msra.mxu0 %v721
    %740 = vmatprep.subr.mxu0 0.0
    %741 = vmatpush1.msra.mxu0 %v722
    %742 = vmatprep.subr.mxu0 0.0
    %743 = vmatpush1.msra.mxu0 0.0
    %744 = vmatprep.subr.mxu0 0.0
    %745 = vmatpush1.msra.mxu0 0.0
    %746 = vmatprep.subr.mxu0 0.0
    %747 = vmatpush1.msra.mxu0 0.0
    %748 = vmatprep.subr.mxu0 0.0
    %749 = vmatpush1.msra.mxu0 0.0
    %750 = vmatprep.subr.mxu0 0.0
    %751 = vmatpush1.msra.mxu0 0.0
    %752 = vmatprep.subr.mxu0 0.0
    %753 = vmatpush1.msra.mxu0 0.0
    %754 = vmatprep.subr.mxu0 0.0
    %755 = vmatpush1.msra.mxu0 0.0
    %756 = vmatprep.subr.mxu0 0.0
    %757 = vmatpush1.msra.mxu0 0.0
    %758 = vmatprep.subr.mxu0 0.0
    %759 = vmatpush1.msra.mxu0 0.0
    %760 = vmatprep.subr.mxu0 0.0
    %761 = vmatpush1.msra.mxu0 0.0
    %762 = vmatprep.subr.mxu0 0.0
    %763 = vmatpush1.msra.mxu0 0.0
    %764 = vmatprep.subr.mxu0 0.0
    %765 = vmatpush1.msra.mxu0 0.0
    %766 = vmatprep.subr.mxu0 0.0
    %767 = vmatpush1.msra.mxu0 0.0
    %768 = vmatprep.subr.mxu0 0.0
    %769 = vmatpush1.msra.mxu0 0.0
    %770 = vmatprep.subr.mxu0 0.0
    %771 = vmatpush1.msra.mxu0 0.0
    %772 = vmatprep.subr.mxu0 0.0
    %773 = vmatpush1.msra.mxu0 0.0
    %774 = vmatprep.subr.mxu0 0.0
    %775 = vmatpush1.msra.mxu0 0.0
    %776 = vmatprep.subr.mxu0 0.0
    %777 = vmatpush1.msra.mxu0 0.0
    %778 = vmatprep.subr.mxu0 0.0
    %779 = vmatpush1.msra.mxu0 0.0
    %780 = vmatprep.subr.mxu0 0.0
    %781 = vmatpush1.msra.mxu0 0.0
    %782 = vmatprep.subr.mxu0 0.0
    %783 = vmatpush1.msra.mxu0 0.0
    %784 = vmatprep.subr.mxu0 0.0
    %785 = vmatpush1.msra.mxu0 0.0
    %786 = vmatprep.subr.mxu0 0.0
    %787 = vmatpush1.msra.mxu0 0.0
    %788 = vmatprep.subr.mxu0 0.0
    %789 = vmatpush1.msra.mxu0 0.0
    %790 = vmatprep.subr.mxu0 0.0
    %791 = vmatpush1.msra.mxu0 0.0
    %792 = vmatprep.subr.mxu0 0.0
    %793 = vmatpush1.msra.mxu0 0.0
    %794 = vmatprep.subr.mxu0 0.0
    %795 = vmatpush1.msra.mxu0 0.0
    %796 = vmatprep.subr.mxu0 0.0
    %797 = vmatpush1.msra.mxu0 0.0
    %798 = vmatprep.subr.mxu0 0.0
    %799 = vmatpush1.msra.mxu0 0.0
    %800 = vmatprep.subr.mxu0 0.0
    %801 = vmatpush1.msra.mxu0 0.0
    %802 = vmatprep.mubr.f32.mxu0 0.0
    %803 = vmatmul.mubr.f32.gmra.mrb[0].mxu0 %v724
    %v804 = vpop.f32.mrb[0].mxu0
    %v805 = vadd.f32 0.0, %v804
    %v806 = vpop.f32.mrb[0].mxu0
    %807 = vmatprep.mubr.f32.mxu0 0.0
    %808 = vmatmul.mubr.f32.gmra.mrb[0].mxu0 %v727
    %v809 = vpop.f32.mrb[0].mxu0
    %v810 = vadd.f32 0.0, %v809
    %v811 = vpop.f32.mrb[0].mxu0
    %812 = vmatprep.mubr.f32.mxu0 0.0
    %813 = vmatmul.mubr.f32.gmra.mrb[0].mxu0 %v730
    %v814 = vpop.f32.mrb[0].mxu0
    %v815 = vpop.f32.mrb[0].mxu0
    %816 = vmatprep.mubr.f32.mxu0 0.0
    %817 = vmatmul.mubr.f32.gmra.mrb[0].mxu0 %v733
    %v818 = vpop.f32.mrb[0].mxu0
    %v819 = vadd.f32 0.0, %v818
    %v820 = vpop.f32.mrb[0].mxu0
    %821 = vmatprep.mubr.f32.mxu0 0.0
    %822 = vmatmul.mubr.f32.gmra.mrb[0].mxu0 %v736
    %v823 = vpop.f32.mrb[0].mxu0
    %v824 = vadd.f32 0.0, %v823
    %v825 = vpop.f32.mrb[0].mxu0
    %826 = vdwg.mxu0
    %v827 = vadd.f32 %v711, %v805
    %v828 = vadd.f32 %v712, %v810
    %v829 = vadd.f32 %v713, %v819
    %v830 = vadd.f32 %v714, %v824
    %v831 = vld [vmem:[%s0 + $0x7] sm:$0xff]
    %v832 = vld [vmem:[%s0 + $0xf] sm:$0xff]
    %v833 = vld [vmem:[%s0 + $0x17] sm:$0xff]
    %v834 = vld [vmem:[%s0 + $0x1f] sm:$0xff]
    %v835 = vld [vmem:[%s0 + $0x27] sm:$0xff]
    %s836 = scalar_lea.vmem %s1, 112
    %v837 = vld [vmem:[%s836] sm:$0xff]
    %v838 = vld [vmem:[%s836 + $0x8] sm:$0xff]
    %v840 = vsel %vm42, %v831, 0
    %v843 = vsel %vm42, %v832, 0
    %v846 = vsel %vm42, %v833, 0
    %v849 = vsel %vm42, %v834, 0
    %v852 = vsel %vm42, %v835, 0
    %854 = vmatprep.subr.mxu0 0.0
    %855 = vmatpush1.msra.mxu0 %v837
    %856 = vmatprep.subr.mxu0 0.0
    %857 = vmatpush1.msra.mxu0 %v838
    %858 = vmatprep.subr.mxu0 0.0
    %859 = vmatpush1.msra.mxu0 0.0
    %860 = vmatprep.subr.mxu0 0.0
    %861 = vmatpush1.msra.mxu0 0.0
    %862 = vmatprep.subr.mxu0 0.0
    %863 = vmatpush1.msra.mxu0 0.0
    %864 = vmatprep.subr.mxu0 0.0
    %865 = vmatpush1.msra.mxu0 0.0
    %866 = vmatprep.subr.mxu0 0.0
    %867 = vmatpush1.msra.mxu0 0.0
    %868 = vmatprep.subr.mxu0 0.0
    %869 = vmatpush1.msra.mxu0 0.0
    %870 = vmatprep.subr.mxu0 0.0
    %871 = vmatpush1.msra.mxu0 0.0
    %872 = vmatprep.subr.mxu0 0.0
    %873 = vmatpush1.msra.mxu0 0.0
    %874 = vmatprep.subr.mxu0 0.0
    %875 = vmatpush1.msra.mxu0 0.0
    %876 = vmatprep.subr.mxu0 0.0
    %877 = vmatpush1.msra.mxu0 0.0
    %878 = vmatprep.subr.mxu0 0.0
    %879 = vmatpush1.msra.mxu0 0.0
    %880 = vmatprep.subr.mxu0 0.0
    %881 = vmatpush1.msra.mxu0 0.0
    %882 = vmatprep.subr.mxu0 0.0
    %883 = vmatpush1.msra.mxu0 0.0
    %884 = vmatprep.subr.mxu0 0.0
    %885 = vmatpush1.msra.mxu0 0.0
    %886 = vmatprep.subr.mxu0 0.0
    %887 = vmatpush1.msra.mxu0 0.0
    %888 = vmatprep.subr.mxu0 0.0
    %889 = vmatpush1.msra.mxu0 0.0
    %890 = vmatprep.subr.mxu0 0.0
    %891 = vmatpush1.msra.mxu0 0.0
    %892 = vmatprep.subr.mxu0 0.0
    %893 = vmatpush1.msra.mxu0 0.0
    %894 = vmatprep.subr.mxu0 0.0
    %895 = vmatpush1.msra.mxu0 0.0
    %896 = vmatprep.subr.mxu0 0.0
    %897 = vmatpush1.msra.mxu0 0.0
    %898 = vmatprep.subr.mxu0 0.0
    %899 = vmatpush1.msra.mxu0 0.0
    %900 = vmatprep.subr.mxu0 0.0
    %901 = vmatpush1.msra.mxu0 0.0
    %902 = vmatprep.subr.mxu0 0.0
    %903 = vmatpush1.msra.mxu0 0.0
    %904 = vmatprep.subr.mxu0 0.0
    %905 = vmatpush1.msra.mxu0 0.0
    %906 = vmatprep.subr.mxu0 0.0
    %907 = vmatpush1.msra.mxu0 0.0
    %908 = vmatprep.subr.mxu0 0.0
    %909 = vmatpush1.msra.mxu0 0.0
    %910 = vmatprep.subr.mxu0 0.0
    %911 = vmatpush1.msra.mxu0 0.0
    %912 = vmatprep.subr.mxu0 0.0
    %913 = vmatpush1.msra.mxu0 0.0
    %914 = vmatprep.subr.mxu0 0.0
    %915 = vmatpush1.msra.mxu0 0.0
    %916 = vmatprep.subr.mxu0 0.0
    %917 = vmatpush1.msra.mxu0 0.0
    %918 = vmatprep.mubr.f32.mxu0 0.0
    %919 = vmatmul.mubr.f32.gmra.mrb[0].mxu0 %v840
    %v920 = vpop.f32.mrb[0].mxu0
    %v921 = vadd.f32 0.0, %v920
    %v922 = vpop.f32.mrb[0].mxu0
    %923 = vmatprep.mubr.f32.mxu0 0.0
    %924 = vmatmul.mubr.f32.gmra.mrb[0].mxu0 %v843
    %v925 = vpop.f32.mrb[0].mxu0
    %v926 = vadd.f32 0.0, %v925
    %v927 = vpop.f32.mrb[0].mxu0
    %928 = vmatprep.mubr.f32.mxu0 0.0
    %929 = vmatmul.mubr.f32.gmra.mrb[0].mxu0 %v846
    %v930 = vpop.f32.mrb[0].mxu0
    %v931 = vpop.f32.mrb[0].mxu0
    %932 = vmatprep.mubr.f32.mxu0 0.0
    %933 = vmatmul.mubr.f32.gmra.mrb[0].mxu0 %v849
    %v934 = vpop.f32.mrb[0].mxu0
    %v935 = vadd.f32 0.0, %v934
    %v936 = vpop.f32.mrb[0].mxu0
    %937 = vmatprep.mubr.f32.mxu0 0.0
    %938 = vmatmul.mubr.f32.gmra.mrb[0].mxu0 %v852
    %v939 = vpop.f32.mrb[0].mxu0
    %v940 = vadd.f32 0.0, %v939
    %v941 = vpop.f32.mrb[0].mxu0
    %942 = vdwg.mxu0
    %v943 = vadd.f32 %v827, %v921
    %v944 = vadd.f32 %v828, %v926
    %v945 = vadd.f32 %v829, %v935
    %v946 = vadd.f32 %v830, %v940
    %v947 = vld [vmem:[%s0 + $0x8] sm:$0xff]
    %v948 = vld [vmem:[%s0 + $0x10] sm:$0xff]
    %v949 = vld [vmem:[%s0 + $0x18] sm:$0xff]
    %v950 = vld [vmem:[%s0 + $0x20] sm:$0xff]
    %v951 = vld [vmem:[%s0 + $0x28] sm:$0xff]
    %s952 = scalar_lea.vmem %s1, 128
    %v953 = vld [vmem:[%s952] sm:$0xff]
    %v954 = vld [vmem:[%s952 + $0x8] sm:$0xff]
    %v956 = vsel %vm42, %v947, 0
    %v959 = vsel %vm42, %v948, 0
    %v962 = vsel %vm42, %v949, 0
    %v965 = vsel %vm42, %v950, 0
    %v968 = vsel %vm42, %v951, 0
    %970 = vmatprep.subr.mxu0 0.0
    %971 = vmatpush1.msra.mxu0 %v953
    %972 = vmatprep.subr.mxu0 0.0
    %973 = vmatpush1.msra.mxu0 %v954
    %974 = vmatprep.subr.mxu0 0.0
    %975 = vmatpush1.msra.mxu0 0.0
    %976 = vmatprep.subr.mxu0 0.0
    %977 = vmatpush1.msra.mxu0 0.0
    %978 = vmatprep.subr.mxu0 0.0
    %979 = vmatpush1.msra.mxu0 0.0
    %980 = vmatprep.subr.mxu0 0.0
    %981 = vmatpush1.msra.mxu0 0.0
    %982 = vmatprep.subr.mxu0 0.0
    %983 = vmatpush1.msra.mxu0 0.0
    %984 = vmatprep.subr.mxu0 0.0
    %985 = vmatpush1.msra.mxu0 0.0
    %986 = vmatprep.subr.mxu0 0.0
    %987 = vmatpush1.msra.mxu0 0.0
    %988 = vmatprep.subr.mxu0 0.0
    %989 = vmatpush1.msra.mxu0 0.0
    %990 = vmatprep.subr.mxu0 0.0
    %991 = vmatpush1.msra.mxu0 0.0
    %992 = vmatprep.subr.mxu0 0.0
    %993 = vmatpush1.msra.mxu0 0.0
    %994 = vmatprep.subr.mxu0 0.0
    %995 = vmatpush1.msra.mxu0 0.0
    %996 = vmatprep.subr.mxu0 0.0
    %997 = vmatpush1.msra.mxu0 0.0
    %998 = vmatprep.subr.mxu0 0.0
    %999 = vmatpush1.msra.mxu0 0.0
    %1000 = vmatprep.subr.mxu0 0.0
    %1001 = vmatpush1.msra.mxu0 0.0
    %1002 = vmatprep.subr.mxu0 0.0
    %1003 = vmatpush1.msra.mxu0 0.0
    %1004 = vmatprep.subr.mxu0 0.0
    %1005 = vmatpush1.msra.mxu0 0.0
    %1006 = vmatprep.subr.mxu0 0.0
    %1007 = vmatpush1.msra.mxu0 0.0
    %1008 = vmatprep.subr.mxu0 0.0
    %1009 = vmatpush1.msra.mxu0 0.0
    %1010 = vmatprep.subr.mxu0 0.0
    %1011 = vmatpush1.msra.mxu0 0.0
    %1012 = vmatprep.subr.mxu0 0.0
    %1013 = vmatpush1.msra.mxu0 0.0
    %1014 = vmatprep.subr.mxu0 0.0
    %1015 = vmatpush1.msra.mxu0 0.0
    %1016 = vmatprep.subr.mxu0 0.0
    %1017 = vmatpush1.msra.mxu0 0.0
    %1018 = vmatprep.subr.mxu0 0.0
    %1019 = vmatpush1.msra.mxu0 0.0
    %1020 = vmatprep.subr.mxu0 0.0
    %1021 = vmatpush1.msra.mxu0 0.0
    %1022 = vmatprep.subr.mxu0 0.0
    %1023 = vmatpush1.msra.mxu0 0.0
    %1024 = vmatprep.subr.mxu0 0.0
    %1025 = vmatpush1.msra.mxu0 0.0
    %1026 = vmatprep.subr.mxu0 0.0
    %1027 = vmatpush1.msra.mxu0 0.0
    %1028 = vmatprep.subr.mxu0 0.0
    %1029 = vmatpush1.msra.mxu0 0.0
    %1030 = vmatprep.subr.mxu0 0.0
    %1031 = vmatpush1.msra.mxu0 0.0
    %1032 = vmatprep.subr.mxu0 0.0
    %1033 = vmatpush1.msra.mxu0 0.0
    %1034 = vmatprep.mubr.f32.mxu0 0.0
    %1035 = vmatmul.mubr.f32.gmra.mrb[0].mxu0 %v956
    %v1036 = vpop.f32.mrb[0].mxu0
    %v1037 = vadd.f32 0.0, %v1036
    %v1038 = vpop.f32.mrb[0].mxu0
    %1039 = vmatprep.mubr.f32.mxu0 0.0
    %1040 = vmatmul.mubr.f32.gmra.mrb[0].mxu0 %v959
    %v1041 = vpop.f32.mrb[0].mxu0
    %v1042 = vadd.f32 0.0, %v1041
    %v1043 = vpop.f32.mrb[0].mxu0
    %1044 = vmatprep.mubr.f32.mxu0 0.0
    %1045 = vmatmul.mubr.f32.gmra.mrb[0].mxu0 %v962
    %v1046 = vpop.f32.mrb[0].mxu0
    %v1047 = vpop.f32.mrb[0].mxu0
    %1048 = vmatprep.mubr.f32.mxu0 0.0
    %1049 = vmatmul.mubr.f32.gmra.mrb[0].mxu0 %v965
    %v1050 = vpop.f32.mrb[0].mxu0
    %v1051 = vadd.f32 0.0, %v1050
    %v1052 = vpop.f32.mrb[0].mxu0
    %1053 = vmatprep.mubr.f32.mxu0 0.0
    %1054 = vmatmul.mubr.f32.gmra.mrb[0].mxu0 %v968
    %v1055 = vpop.f32.mrb[0].mxu0
    %v1056 = vadd.f32 0.0, %v1055
    %v1057 = vpop.f32.mrb[0].mxu0
    %1058 = vdwg.mxu0
    %v1059 = vadd.f32 %v943, %v1037
    %v1060 = vadd.f32 %v944, %v1042
    %v1061 = vadd.f32 %v945, %v1051
    %v1062 = vadd.f32 %v946, %v1056
    %v1063 = vld [vmem:[%s2] sm:$0x1]
    %v1065 = vlaneseq
    %v1066 = vshrl.u32 %v1065, 7
    %v1067 = vsub.s32 0, %v1066
    %v1068 = vrot.slane %v1063, %v1067
    %v1070 = vadd.f32 %v1059, %v1068
    %v1071 = vadd.f32 %v1060, %v1068
    %v1072 = vadd.f32 %v1061, %v1068
    %v1073 = vadd.f32 %v1062, %v1068
    %v1074 = vmax.f32 %v1070, 0.0
    %v1075 = vmax.f32 %v1071, 0.0
    %v1076 = vmax.f32 %v1072, 0.0
    %v1077 = vmax.f32 %v1073, 0.0
    %vm1078 = vcmask 779264
    %1079 = vst.msk [vmem:[#allocation2] sm:$0x3] %vm1078, 0.0
    %vm1080 = vcmask 60416
    %v1081 = vsel %vm1080, %v1074, -inf
    %v1082 = vrot.slane %v1081, 4
    %v1083 = vmax.f32 %v1081, %v1082
    %v1084 = vrot.slane %v1083, 2
    %v1085 = vmax.f32 %v1083, %v1084
    %v1086 = vrot.slane %v1085, 1
    %v1087 = vmax.f32 %v1085, %v1086
    %vm1088 = vcmask 57344
    %1089 = vst.msk [vmem:[#allocation2] sm:$0x1] %vm1088, %v1087
    %vm1090 = vcmask 63491
    %v1091 = vsel %vm1090, %v1074, -inf
    %v1092 = vrot.slane %v1091, 4
    %v1093 = vmax.f32 %v1091, %v1092
    %v1094 = vrot.slane %v1093, 2
    %v1095 = vmax.f32 %v1093, %v1094
    %v1096 = vrot.slane %v1095, 1
    %v1097 = vmax.f32 %v1095, %v1096
    %1099 = vrot.lane.b32.xlu0 %v1097, 8
    %v1100 = vpop.permute.xlu0 %1099
    %vm1102 = vcmask 122944
    %1103 = vst.msk [vmem:[#allocation2] sm:$0x1] %vm1102, %v1100
    %vm1104 = vcmask 64519
    %v1105 = vsel %vm1104, %v1074, -inf
    %vm1106 = vcmask 59392
    %v1107 = vsel %vm1106, %v1075, -inf
    %v1108 = vmax.f32 %v1105, %v1107
    %v1109 = vrot.slane %v1108, 4
    %v1110 = vmax.f32 %v1108, %v1109
    %v1111 = vrot.slane %v1110, 2
    %v1112 = vmax.f32 %v1110, %v1111
    %v1113 = vrot.slane %v1112, 1
    %v1114 = vmax.f32 %v1112, %v1113
    %1116 = vrot.lane.b32.xlu0 %v1114, 16
    %v1117 = vpop.permute.xlu0 %1116
    %vm1119 = vcmask 188544
    %1120 = vst.msk [vmem:[#allocation2] sm:$0x1] %vm1119, %v1117
    %vm1121 = vcmask 62466
    %v1122 = vsel %vm1121, %v1075, -inf
    %v1123 = vrot.slane %v1122, 4
    %v1124 = vmax.f32 %v1122, %v1123
    %v1125 = vrot.slane %v1124, 2
    %v1126 = vmax.f32 %v1124, %v1125
    %v1127 = vrot.slane %v1126, 1
    %v1128 = vmax.f32 %v1126, %v1127
    %1130 = vrot.lane.b32.xlu0 %v1128, 24
    %v1131 = vpop.permute.xlu0 %1130
    %vm1133 = vcmask 254144
    %1134 = vst.msk [vmem:[#allocation2] sm:$0x1] %vm1133, %v1131
    %vm1135 = vcmask 124992
    %v1136 = vsel %vm1135, %v1074, -inf
    %v1137 = vrot.slane %v1136, 4
    %v1138 = vmax.f32 %v1136, %v1137
    %v1139 = vrot.slane %v1138, 2
    %v1140 = vmax.f32 %v1138, %v1139
    %v1141 = vrot.slane %v1140, 1
    %v1142 = vmax.f32 %v1140, %v1141
    %1144 = vrot.lane.b32.xlu0 %v1142, 24
    %v1145 = vpop.permute.xlu0 %1144
    %vm1147 = vcmask 319744
    %1148 = vst.msk [vmem:[#allocation2] sm:$0x1] %vm1147, %v1145
    %vm1149 = vcmask 128067
    %v1150 = vsel %vm1149, %v1074, -inf
    %v1151 = vrot.slane %v1150, 4
    %v1152 = vmax.f32 %v1150, %v1151
    %v1153 = vrot.slane %v1152, 2
    %v1154 = vmax.f32 %v1152, %v1153
    %v1155 = vrot.slane %v1154, 1
    %v1156 = vmax.f32 %v1154, %v1155
    %1158 = vrot.lane.b32.xlu0 %v1156, 32
    %v1159 = vpop.permute.xlu0 %1158
    %vm1161 = vcmask 385344
    %1162 = vst.msk [vmem:[#allocation2] sm:$0x1] %vm1161, %v1159
    %vm1163 = vcmask 130118
    %v1164 = vsel %vm1163, %v1074, -inf
    %v1165 = vsel %vm1102, %v1075, -inf
    %v1166 = vmax.f32 %v1164, %v1165
    %v1167 = vrot.slane %v1166, 4
    %v1168 = vmax.f32 %v1166, %v1167
    %v1169 = vrot.slane %v1168, 2
    %v1170 = vmax.f32 %v1168, %v1169
    %v1171 = vrot.slane %v1170, 1
    %v1172 = vmax.f32 %v1170, %v1171
    %1174 = vrot.lane.b32.xlu0 %v1172, 40
    %v1175 = vpop.permute.xlu0 %1174
    %vm1177 = vcmask 450944
    %1178 = vst.msk [vmem:[#allocation2] sm:$0x1] %vm1177, %v1175
    %vm1179 = vcmask 126017
    %v1180 = vsel %vm1179, %v1075, -inf
    %v1181 = vrot.slane %v1180, 4
    %v1182 = vmax.f32 %v1180, %v1181
    %v1183 = vrot.slane %v1182, 2
    %v1184 = vmax.f32 %v1182, %v1183
    %v1185 = vrot.slane %v1184, 1
    %v1186 = vmax.f32 %v1184, %v1185
    %1188 = vrot.lane.b32.xlu0 %v1186, 48
    %v1189 = vpop.permute.xlu0 %1188
    %vm1191 = vcmask 516544
    %1192 = vst.msk [vmem:[#allocation2] sm:$0x1] %vm1191, %v1189
    %vm1193 = vcmask 189568
    %v1194 = vsel %vm1193, %v1074, -inf
    %v1195 = vrot.slane %v1194, 4
    %v1196 = vmax.f32 %v1194, %v1195
    %v1197 = vrot.slane %v1196, 2
    %v1198 = vmax.f32 %v1196, %v1197
    %v1199 = vrot.slane %v1198, 1
    %v1200 = vmax.f32 %v1198, %v1199
    %1202 = vrot.lane.b32.xlu0 %v1200, 48
    %v1203 = vpop.permute.xlu0 %1202
    %vm1205 = vcmask 582144
    %1206 = vst.msk [vmem:[#allocation2] sm:$0x1] %vm1205, %v1203
    %vm1207 = vcmask 191618
    %v1208 = vsel %vm1207, %v1074, -inf
    %v1209 = vrot.slane %v1208, 4
    %v1210 = vmax.f32 %v1208, %v1209
    %v1211 = vrot.slane %v1210, 2
    %v1212 = vmax.f32 %v1210, %v1211
    %v1213 = vrot.slane %v1212, 1
    %v1214 = vmax.f32 %v1212, %v1213
    %1216 = vrot.lane.b32.xlu0 %v1214, 56
    %v1217 = vpop.permute.xlu0 %1216
    %vm1219 = vcmask 647744
    %1220 = vst.msk [vmem:[#allocation2] sm:$0x1] %vm1219, %v1217
    %vm1221 = vcmask 193668
    %v1222 = vsel %vm1221, %v1074, -inf
    %v1223 = vrot.slane %v1222, 4
    %v1224 = vmax.f32 %v1222, %v1223
    %v1225 = vrot.slane %v1224, 2
    %v1226 = vmax.f32 %v1224, %v1225
    %v1227 = vrot.slane %v1226, 1
    %v1228 = vmax.f32 %v1226, %v1227
    %1230 = vrot.lane.b32.xlu0 %v1228, 64
    %v1231 = vpop.permute.xlu0 %1230
    %vm1233 = vcmask 713344
    %1234 = vst.msk [vmem:[#allocation2] sm:$0x1] %vm1233, %v1231
    %vm1235 = vcmask 195718
    %v1236 = vsel %vm1235, %v1074, -inf
    %v1237 = vrot.slane %v1236, 4
    %v1238 = vmax.f32 %v1236, %v1237
    %v1239 = vrot.slane %v1238, 2
    %v1240 = vmax.f32 %v1238, %v1239
    %v1241 = vrot.slane %v1240, 1
    %v1242 = vmax.f32 %v1240, %v1241
    %1244 = vrot.lane.b32.xlu0 %v1242, 72
    %v1245 = vpop.permute.xlu0 %1244
    %vm1247 = vcmask 778944
    %1248 = vst.msk [vmem:[#allocation2] sm:$0x1] %vm1247, %v1245
    %v1249 = vsel %vm1080, %v1076, -inf
    %v1250 = vrot.slane %v1249, 4
    %v1251 = vmax.f32 %v1249, %v1250
    %v1252 = vrot.slane %v1251, 2
    %v1253 = vmax.f32 %v1251, %v1252
    %v1254 = vrot.slane %v1253, 1
    %v1255 = vmax.f32 %v1253, %v1254
    %1256 = vst.msk [vmem:[#allocation2 + $0x1] sm:$0x1] %vm1088, %v1255
    %v1257 = vsel %vm1090, %v1076, -inf
    %v1258 = vrot.slane %v1257, 4
    %v1259 = vmax.f32 %v1257, %v1258
    %v1260 = vrot.slane %v1259, 2
    %v1261 = vmax.f32 %v1259, %v1260
    %v1262 = vrot.slane %v1261, 1
    %v1263 = vmax.f32 %v1261, %v1262
    %1265 = vrot.lane.b32.xlu0 %v1263, 8
    %v1266 = vpop.permute.xlu0 %1265
    %1268 = vst.msk [vmem:[#allocation2 + $0x1] sm:$0x1] %vm1102, %v1266
    %v1269 = vsel %vm1104, %v1076, -inf
    %v1270 = vsel %vm1106, %v1077, -inf
    %v1271 = vmax.f32 %v1269, %v1270
    %v1272 = vrot.slane %v1271, 4
    %v1273 = vmax.f32 %v1271, %v1272
    %v1274 = vrot.slane %v1273, 2
    %v1275 = vmax.f32 %v1273, %v1274
    %v1276 = vrot.slane %v1275, 1
    %v1277 = vmax.f32 %v1275, %v1276
    %1279 = vrot.lane.b32.xlu0 %v1277, 16
    %v1280 = vpop.permute.xlu0 %1279
    %1282 = vst.msk [vmem:[#allocation2 + $0x1] sm:$0x1] %vm1119, %v1280
    %v1283 = vsel %vm1121, %v1077, -inf
    %v1284 = vrot.slane %v1283, 4
    %v1285 = vmax.f32 %v1283, %v1284
    %v1286 = vrot.slane %v1285, 2
    %v1287 = vmax.f32 %v1285, %v1286
    %v1288 = vrot.slane %v1287, 1
    %v1289 = vmax.f32 %v1287, %v1288
    %1291 = vrot.lane.b32.xlu0 %v1289, 24
    %v1292 = vpop.permute.xlu0 %1291
    %1294 = vst.msk [vmem:[#allocation2 + $0x1] sm:$0x1] %vm1133, %v1292
    %v1295 = vsel %vm1135, %v1076, -inf
    %v1296 = vrot.slane %v1295, 4
    %v1297 = vmax.f32 %v1295, %v1296
    %v1298 = vrot.slane %v1297, 2
    %v1299 = vmax.f32 %v1297, %v1298
    %v1300 = vrot.slane %v1299, 1
    %v1301 = vmax.f32 %v1299, %v1300
    %1303 = vrot.lane.b32.xlu0 %v1301, 24
    %v1304 = vpop.permute.xlu0 %1303
    %1306 = vst.msk [vmem:[#allocation2 + $0x1] sm:$0x1] %vm1147, %v1304
    %v1307 = vsel %vm1149, %v1076, -inf
    %v1308 = vrot.slane %v1307, 4
    %v1309 = vmax.f32 %v1307, %v1308
    %v1310 = vrot.slane %v1309, 2
    %v1311 = vmax.f32 %v1309, %v1310
    %v1312 = vrot.slane %v1311, 1
    %v1313 = vmax.f32 %v1311, %v1312
    %1315 = vrot.lane.b32.xlu0 %v1313, 32
    %v1316 = vpop.permute.xlu0 %1315
    %1318 = vst.msk [vmem:[#allocation2 + $0x1] sm:$0x1] %vm1161, %v1316
    %v1319 = vsel %vm1163, %v1076, -inf
    %v1320 = vsel %vm1102, %v1077, -inf
    %v1321 = vmax.f32 %v1319, %v1320
    %v1322 = vrot.slane %v1321, 4
    %v1323 = vmax.f32 %v1321, %v1322
    %v1324 = vrot.slane %v1323, 2
    %v1325 = vmax.f32 %v1323, %v1324
    %v1326 = vrot.slane %v1325, 1
    %v1327 = vmax.f32 %v1325, %v1326
    %1329 = vrot.lane.b32.xlu0 %v1327, 40
    %v1330 = vpop.permute.xlu0 %1329
    %1332 = vst.msk [vmem:[#allocation2 + $0x1] sm:$0x1] %vm1177, %v1330
    %v1333 = vsel %vm1179, %v1077, -inf
    %v1334 = vrot.slane %v1333, 4
    %v1335 = vmax.f32 %v1333, %v1334
    %v1336 = vrot.slane %v1335, 2
    %v1337 = vmax.f32 %v1335, %v1336
    %v1338 = vrot.slane %v1337, 1
    %v1339 = vmax.f32 %v1337, %v1338
    %1341 = vrot.lane.b32.xlu0 %v1339, 48
    %v1342 = vpop.permute.xlu0 %1341
    %1344 = vst.msk [vmem:[#allocation2 + $0x1] sm:$0x1] %vm1191, %v1342
    %v1345 = vsel %vm1193, %v1076, -inf
    %v1346 = vrot.slane %v1345, 4
    %v1347 = vmax.f32 %v1345, %v1346
    %v1348 = vrot.slane %v1347, 2
    %v1349 = vmax.f32 %v1347, %v1348
    %v1350 = vrot.slane %v1349, 1
    %v1351 = vmax.f32 %v1349, %v1350
    %1353 = vrot.lane.b32.xlu0 %v1351, 48
    %v1354 = vpop.permute.xlu0 %1353
    %1356 = vst.msk [vmem:[#allocation2 + $0x1] sm:$0x1] %vm1205, %v1354
    %v1357 = vsel %vm1207, %v1076, -inf
    %v1358 = vrot.slane %v1357, 4
    %v1359 = vmax.f32 %v1357, %v1358
    %v1360 = vrot.slane %v1359, 2
    %v1361 = vmax.f32 %v1359, %v1360
    %v1362 = vrot.slane %v1361, 1
    %v1363 = vmax.f32 %v1361, %v1362
    %1365 = vrot.lane.b32.xlu0 %v1363, 56
    %v1366 = vpop.permute.xlu0 %1365
    %1368 = vst.msk [vmem:[#allocation2 + $0x1] sm:$0x1] %vm1219, %v1366
    %v1369 = vsel %vm1221, %v1076, -inf
    %v1370 = vrot.slane %v1369, 4
    %v1371 = vmax.f32 %v1369, %v1370
    %v1372 = vrot.slane %v1371, 2
    %v1373 = vmax.f32 %v1371, %v1372
    %v1374 = vrot.slane %v1373, 1
    %v1375 = vmax.f32 %v1373, %v1374
    %1377 = vrot.lane.b32.xlu0 %v1375, 64
    %v1378 = vpop.permute.xlu0 %1377
    %1380 = vst.msk [vmem:[#allocation2 + $0x1] sm:$0x1] %vm1233, %v1378
    %v1381 = vsel %vm1235, %v1076, -inf
    %v1382 = vrot.slane %v1381, 4
    %v1383 = vmax.f32 %v1381, %v1382
    %v1384 = vrot.slane %v1383, 2
    %v1385 = vmax.f32 %v1383, %v1384
    %v1386 = vrot.slane %v1385, 1
    %v1387 = vmax.f32 %v1385, %v1386
    %1389 = vrot.lane.b32.xlu0 %v1387, 72
    %v1390 = vpop.permute.xlu0 %1389
    %1392 = vst.msk [vmem:[#allocation2 + $0x1] sm:$0x1] %vm1247, %v1390
    %v1393 = vld [vmem:[#allocation2] sm:$0x3]
    %v1394 = vld [vmem:[%s3] sm:$0xff]
    %v1395 = vld [vmem:[%s3 + $0x8] sm:$0xff]
    %v1396 = vld [vmem:[%s3 + $0x10] sm:$0xff]
    %v1397 = vld [vmem:[%s3 + $0x18] sm:$0xff]
    %v1398 = vld [vmem:[%s3 + $0x20] sm:$0xff]
    %v1399 = vld [vmem:[%s3 + $0x28] sm:$0xff]
    %v1400 = vld [vmem:[%s3 + $0x30] sm:$0xff]
    %v1401 = vld [vmem:[%s3 + $0x38] sm:$0xff]
    %v1402 = vld [vmem:[%s3 + $0x40] sm:$0xff]
    %v1403 = vld [vmem:[%s3 + $0x48] sm:$0xff]
    %v1404 = vld [vmem:[%s3 + $0x50] sm:$0xff]
    %v1405 = vld [vmem:[%s3 + $0x58] sm:$0xff]
    %v1406 = vld [vmem:[%s4] sm:$0x1]
    %v1408 = vlaneseq
    %v1409 = vshrl.u32 %v1408, 7
    %v1410 = vsub.s32 0, %v1409
    %v1411 = vrot.slane %v1406, %v1410
    %vm1413 = vcmask 785408
    %v1415 = vsel %vm1413, %v1393, 0
    %1417 = vmatprep.subr.mxu0 0.0
    %1418 = vmatpush1.msra.mxu0 %v1394
    %1419 = vmatprep.subr.mxu0 0.0
    %1420 = vmatpush1.msra.mxu0 %v1395
    %1421 = vmatprep.subr.mxu0 0.0
    %1422 = vmatpush1.msra.mxu0 %v1396
    %1423 = vmatprep.subr.mxu0 0.0
    %1424 = vmatpush1.msra.mxu0 %v1397
    %1425 = vmatprep.subr.mxu0 0.0
    %1426 = vmatpush1.msra.mxu0 %v1398
    %1427 = vmatprep.subr.mxu0 0.0
    %1428 = vmatpush1.msra.mxu0 %v1399
    %1429 = vmatprep.subr.mxu0 0.0
    %1430 = vmatpush1.msra.mxu0 %v1400
    %1431 = vmatprep.subr.mxu0 0.0
    %1432 = vmatpush1.msra.mxu0 %v1401
    %1433 = vmatprep.subr.mxu0 0.0
    %1434 = vmatpush1.msra.mxu0 %v1402
    %1435 = vmatprep.subr.mxu0 0.0
    %1436 = vmatpush1.msra.mxu0 %v1403
    %1437 = vmatprep.subr.mxu0 0.0
    %1438 = vmatpush1.msra.mxu0 %v1404
    %1439 = vmatprep.subr.mxu0 0.0
    %1440 = vmatpush1.msra.mxu0 %v1405
    %1441 = vmatprep.subr.mxu0 0.0
    %1442 = vmatpush1.msra.mxu0 0.0
    %1443 = vmatprep.subr.mxu0 0.0
    %1444 = vmatpush1.msra.mxu0 0.0
    %1445 = vmatprep.subr.mxu0 0.0
    %1446 = vmatpush1.msra.mxu0 0.0
    %1447 = vmatprep.subr.mxu0 0.0
    %1448 = vmatpush1.msra.mxu0 0.0
    %1449 = vmatprep.subr.mxu0 0.0
    %1450 = vmatpush1.msra.mxu0 0.0
    %1451 = vmatprep.subr.mxu0 0.0
    %1452 = vmatpush1.msra.mxu0 0.0
    %1453 = vmatprep.subr.mxu0 0.0
    %1454 = vmatpush1.msra.mxu0 0.0
    %1455 = vmatprep.subr.mxu0 0.0
    %1456 = vmatpush1.msra.mxu0 0.0
    %1457 = vmatprep.subr.mxu0 0.0
    %1458 = vmatpush1.msra.mxu0 0.0
    %1459 = vmatprep.subr.mxu0 0.0
    %1460 = vmatpush1.msra.mxu0 0.0
    %1461 = vmatprep.subr.mxu0 0.0
    %1462 = vmatpush1.msra.mxu0 0.0
    %1463 = vmatprep.subr.mxu0 0.0
    %1464 = vmatpush1.msra.mxu0 0.0
    %1465 = vmatprep.subr.mxu0 0.0
    %1466 = vmatpush1.msra.mxu0 0.0
    %1467 = vmatprep.subr.mxu0 0.0
    %1468 = vmatpush1.msra.mxu0 0.0
    %1469 = vmatprep.subr.mxu0 0.0
    %1470 = vmatpush1.msra.mxu0 0.0
    %1471 = vmatprep.subr.mxu0 0.0
    %1472 = vmatpush1.msra.mxu0 0.0
    %1473 = vmatprep.subr.mxu0 0.0
    %1474 = vmatpush1.msra.mxu0 0.0
    %1475 = vmatprep.subr.mxu0 0.0
    %1476 = vmatpush1.msra.mxu0 0.0
    %1477 = vmatprep.subr.mxu0 0.0
    %1478 = vmatpush1.msra.mxu0 0.0
    %1479 = vmatprep.subr.mxu0 0.0
    %1480 = vmatpush1.msra.mxu0 0.0
    %1481 = vmatprep.mubr.f32.mxu0 0.0
    %1482 = vmatmul.mubr.f32.gmra.mrb[0].mxu0 %v1415
    %v1483 = vpop.f32.mrb[0].mxu0
    %v1484 = vadd.f32 %v1411, %v1483
    %v1485 = vpop.f32.mrb[0].mxu0
    %1486 = vdwg.mxu0
    %v1487 = vmax.f32 %v1484, 0.0
    %v1488 = vld [vmem:[%s5] sm:$0xff]
    %v1489 = vld [vmem:[%s5 + $0x8] sm:$0xff]
    %v1490 = vld [vmem:[%s5 + $0x10] sm:$0xff]
    %v1491 = vld [vmem:[%s5 + $0x18] sm:$0xff]
    %v1492 = vld [vmem:[%s6] sm:$0x1]
    %v1494 = vlaneseq
    %v1495 = vshrl.u32 %v1494, 7
    %v1496 = vsub.s32 0, %v1495
    %v1497 = vrot.slane %v1492, %v1496
    %vm1499 = vcmask 261120
    %v1501 = vsel %vm1499, %v1487, 0
    %1503 = vmatprep.subr.mxu0 0.0
    %1504 = vmatpush1.msra.mxu0 %v1488
    %1505 = vmatprep.subr.mxu0 0.0
    %1506 = vmatpush1.msra.mxu0 %v1489
    %1507 = vmatprep.subr.mxu0 0.0
    %1508 = vmatpush1.msra.mxu0 %v1490
    %1509 = vmatprep.subr.mxu0 0.0
    %1510 = vmatpush1.msra.mxu0 %v1491
    %1511 = vmatprep.subr.mxu0 0.0
    %1512 = vmatpush1.msra.mxu0 0.0
    %1513 = vmatprep.subr.mxu0 0.0
    %1514 = vmatpush1.msra.mxu0 0.0
    %1515 = vmatprep.subr.mxu0 0.0
    %1516 = vmatpush1.msra.mxu0 0.0
    %1517 = vmatprep.subr.mxu0 0.0
    %1518 = vmatpush1.msra.mxu0 0.0
    %1519 = vmatprep.subr.mxu0 0.0
    %1520 = vmatpush1.msra.mxu0 0.0
    %1521 = vmatprep.subr.mxu0 0.0
    %1522 = vmatpush1.msra.mxu0 0.0
    %1523 = vmatprep.subr.mxu0 0.0
    %1524 = vmatpush1.msra.mxu0 0.0
    %1525 = vmatprep.subr.mxu0 0.0
    %1526 = vmatpush1.msra.mxu0 0.0
    %1527 = vmatprep.subr.mxu0 0.0
    %1528 = vmatpush1.msra.mxu0 0.0
    %1529 = vmatprep.subr.mxu0 0.0
    %1530 = vmatpush1.msra.mxu0 0.0
    %1531 = vmatprep.subr.mxu0 0.0
    %1532 = vmatpush1.msra.mxu0 0.0
    %1533 = vmatprep.subr.mxu0 0.0
    %1534 = vmatpush1.msra.mxu0 0.0
    %1535 = vmatprep.subr.mxu0 0.0
    %1536 = vmatpush1.msra.mxu0 0.0
    %1537 = vmatprep.subr.mxu0 0.0
    %1538 = vmatpush1.msra.mxu0 0.0
    %1539 = vmatprep.subr.mxu0 0.0
    %1540 = vmatpush1.msra.mxu0 0.0
    %1541 = vmatprep.subr.mxu0 0.0
    %1542 = vmatpush1.msra.mxu0 0.0
    %1543 = vmatprep.subr.mxu0 0.0
    %1544 = vmatpush1.msra.mxu0 0.0
    %1545 = vmatprep.subr.mxu0 0.0
    %1546 = vmatpush1.msra.mxu0 0.0
    %1547 = vmatprep.subr.mxu0 0.0
    %1548 = vmatpush1.msra.mxu0 0.0
    %1549 = vmatprep.subr.mxu0 0.0
    %1550 = vmatpush1.msra.mxu0 0.0
    %1551 = vmatprep.subr.mxu0 0.0
    %1552 = vmatpush1.msra.mxu0 0.0
    %1553 = vmatprep.subr.mxu0 0.0
    %1554 = vmatpush1.msra.mxu0 0.0
    %1555 = vmatprep.subr.mxu0 0.0
    %1556 = vmatpush1.msra.mxu0 0.0
    %1557 = vmatprep.subr.mxu0 0.0
    %1558 = vmatpush1.msra.mxu0 0.0
    %1559 = vmatprep.subr.mxu0 0.0
    %1560 = vmatpush1.msra.mxu0 0.0
    %1561 = vmatprep.subr.mxu0 0.0
    %1562 = vmatpush1.msra.mxu0 0.0
    %1563 = vmatprep.subr.mxu0 0.0
    %1564 = vmatpush1.msra.mxu0 0.0
    %1565 = vmatprep.subr.mxu0 0.0
    %1566 = vmatpush1.msra.mxu0 0.0
    %1567 = vmatprep.mubr.f32.mxu0 0.0
    %1568 = vmatmul.mubr.f32.gmra.mrb[0].mxu0 %v1501
    %v1569 = vpop.f32.mrb[0].mxu0
    %v1570 = vadd.f32 %v1497, %v1569
    %v1571 = vpop.f32.mrb[0].mxu0
    %1572 = vdwg.mxu0
    %vm1573 = vcmask 41984
    %1574 = vst.msk [vmem:[#allocation3] sm:$0x3] %vm1573, %v1570
    // Predicated region
    $region30: #{_lambda_.1} parent=1 // pred_check
      _
    $region31: #{_lambda_.1} parent=1 // pred_check_branch
      %1576 = sbr.rel (0) target = $region33
    $region32: #{_lambda_.1} parent=1 // pred_region
      %s1578 = ssub.s32 32, 32
      %1579 = vsyncadd [#allocation4], %s1578
      %s1581 = sshll.u32 [#allocation3], 4
      %s1582 = int_to_ptr.vmem [resolvable:$true] %s1581
      %1584 = dma.vmem_to_hbm [thread:$0]  %s1582, 32, %s7, [#allocation4]
    $region33: #{_lambda_.1} parent=1 // pred_fallthru
      _
    // Predicated region
    $region34: #{_lambda_.1} parent=1 // pred_check
      _
    $region35: #{_lambda_.1} parent=1 // pred_check_branch
      %1586 = sbr.rel (0) target = $region37
    $region36: #{_lambda_.1} parent=1 // pred_region
      %1587 = dma.done [#allocation4], 32
    $region37: #{_lambda_.1} parent=1 // pred_fallthru
      _
    %1588 = vsyncpa [#allocation4], 1

</llo_original>
